<compile_context>
chip_gen: v6e
topology: v6e:2x2x1
jax: 0.10.0
libtpu: 0.0.40
codegen_flags: <defaults>
</compile_context>

<pallas_src>
import math
import jax
import jax.numpy as jnp
from jax.experimental import pallas as pl
from jax.experimental.pallas import tpu as pltpu  # noqa: F401

# ----------------------------- configuration --------------------------------
B, S = 2, 8                 # batch, sequence length
HIDDEN = 32                 # hidden_size
N_HEADS = 4
N_KV_HEADS = 2
HEAD_DIM = HIDDEN // N_HEADS
HALF = HEAD_DIM // 2
GROUP = N_HEADS // N_KV_HEADS
INTER = 64                  # MLP intermediate size
ROPE_THETA = 10000.0
RMS_EPS = 1e-6
ATTN_SOFTCAP = 50.0         # attn_logit_softcapping (Gemma2 style)
SCALE = 1.0 / math.sqrt(HEAD_DIM)
PRE_TANH = SCALE / ATTN_SOFTCAP   # fold SCALE and 1/softcap into one constant

T = B * S                   # all rows folded into one slab
QKV_OUT = (N_HEADS + 2 * N_KV_HEADS) * HEAD_DIM


# ------------------------------- kernel -------------------------------------
def gemma2_block_kernel(x_ref, norms_ref, wqkv_ref, wo_ref, wgu_ref, wd_ref,
                        rope_ref, rot_ref, bias_ref, out_ref):
    x = x_ref[...].astype(jnp.float32)                     # (T, HIDDEN)
    norms = norms_ref[...]                                 # (4, HIDDEN)

    def rms(t, w):
        # Gemma-style RMSNorm: t * rsqrt(mean(t^2)+eps) * (1 + w)
        var = jnp.mean(t * t, axis=-1, keepdims=True)
        return t * jax.lax.rsqrt(var + RMS_EPS) * (1.0 + w)

    # ---- pre-attention norm --------------------------------------------------
    hn = rms(x, norms[0])                                  # (T, HIDDEN)

    # ---- head-batched q/k/v projections --------------------------------------
    # Single shared LHS broadcast feeds q, k and v; k/v contract against only
    # N_KV_HEADS weight slabs (no GQA weight repeat).  The broadcast-free
    # einsum('td,hdk->htk') would need a (1,0,2) result transpose that Mosaic
    # does not lower, so the small proven broadcast is kept.
    hb = jnp.broadcast_to(hn[None], (N_HEADS, T, HIDDEN))
    wq = wqkv_ref[0:N_HEADS]                               # (H,  HIDDEN, Dh)
    wk = wqkv_ref[N_HEADS:N_HEADS + N_KV_HEADS]            # (KV, HIDDEN, Dh)
    wv = wqkv_ref[N_HEADS + N_KV_HEADS:N_HEADS + 2 * N_KV_HEADS]
    q = jnp.einsum('htd,hdk->htk', hb, wq,
                   preferred_element_type=jnp.float32)     # (H,  T, Dh)
    k = jnp.einsum('htd,hdk->htk', hb[:N_KV_HEADS], wk,
                   preferred_element_type=jnp.float32)     # (KV, T, Dh)
    v = jnp.einsum('htd,hdk->htk', hb[:N_KV_HEADS], wv,
                   preferred_element_type=jnp.float32)     # (KV, T, Dh)

    # ---- RoPE: t*cos + (t @ R)*sin, rotate-half sign folded into R ------------
    cos = rope_ref[0]                                      # (T, Dh)
    sin = rope_ref[1]
    rot = rot_ref[...]                                     # (H, Dh, Dh)

    def rope(t, rmat):
        t_rot = jnp.einsum('htd,hde->hte', t, rmat,
                           preferred_element_type=jnp.float32)
        return t * cos[None] + t_rot * sin[None]

    q = rope(q, rot)
    k = rope(k, rot[:N_KV_HEADS])

    # ---- GQA: fold query-head group into the M dim of the score matmul --------
    # q: (H, T, Dh) -> (KV, GROUP*T, Dh) via row concat of per-head slabs.
    qg = jnp.concatenate(
        [jnp.concatenate([q[h:h + 1]
                          for h in range(g * GROUP, (g + 1) * GROUP)], axis=1)
         for g in range(N_KV_HEADS)], axis=0)              # (KV, GROUP*T, Dh)

    # ---- attention (scores + soft-cap + precomputed additive mask) ------------
    s = jnp.einsum('gqd,gkd->gqk', qg, k,
                   preferred_element_type=jnp.float32)     # (KV, GROUP*T, T)
    s = ATTN_SOFTCAP * jnp.tanh(s * PRE_TANH) + bias_ref[...][None]
    m = jnp.max(s, axis=-1, keepdims=True)
    p = jnp.exp(s - m)
    p = p * pl.reciprocal(jnp.sum(p, axis=-1, keepdims=True), approx=True)
    o = jnp.einsum('gqk,gkd->gqd', p, v,
                   preferred_element_type=jnp.float32)     # (KV, GROUP*T, Dh)

    # ---- output projection: lane-dense repack + ONE head-reducing MXU matmul --
    o_cat = jnp.concatenate(
        [o[g, j * T:(j + 1) * T, :]
         for g in range(N_KV_HEADS) for j in range(GROUP)], axis=-1)  # (T, H*Dh)
    attn_out = jnp.dot(o_cat, wo_ref[...], preferred_element_type=jnp.float32)

    # ---- post-attention norm + residual ---------------------------------------
    h = x + rms(attn_out, norms[1])

    # ---- pre-MLP norm, fused GeGLU MLP (single gate|up matmul) -----------------
    hn2 = rms(h, norms[2])
    gu = jnp.dot(hn2, wgu_ref[...], preferred_element_type=jnp.float32)  # (T, 2*INTER)
    gate = gu[:, :INTER]
    up = gu[:, INTER:]
    act = 0.5 * gate * (1.0 + jnp.tanh(0.7978845608028654 *
                                       (gate + 0.044715 * gate * gate * gate))) * up
    mlp_out = jnp.dot(act, wd_ref[...], preferred_element_type=jnp.float32)

    # ---- post-MLP norm + residual -----------------------------------------------
    out_ref[...] = (h + rms(mlp_out, norms[3])).astype(out_ref.dtype)


# ------------------------------- wrapper -------------------------------------
def gemma2_block(x, params, cos, sin):
    n1, n2, n3, n4, wqkv, wo, wg, wu, wd = params

    # Host-side repacking: layout plumbing done once, outside the kernel.
    norms = jnp.concatenate([n1, n2, n3, n4], axis=0)                 # (4, HIDDEN)

    wq = wqkv[:, : N_HEADS * HEAD_DIM]
    wk = wqkv[:, N_HEADS * HEAD_DIM:(N_HEADS + N_KV_HEADS) * HEAD_DIM]
    wv = wqkv[:, (N_HEADS + N_KV_HEADS) * HEAD_DIM:]

    def per_head(w, n_h):        # (HIDDEN, n_h*Dh) -> (n_h, HIDDEN, Dh)
        return jnp.transpose(w.reshape(HIDDEN, n_h, HEAD_DIM), (1, 0, 2))

    # single per-head weight slab: [q heads | k kv-heads | v kv-heads]
    wqkv3 = jnp.concatenate([per_head(wq, N_HEADS),
                             per_head(wk, N_KV_HEADS),
                             per_head(wv, N_KV_HEADS)], axis=0)       # (H+2*KV, HIDDEN, Dh)

    wgu = jnp.concatenate([wg, wu], axis=1)                           # (HIDDEN, 2*INTER)

    rope = jnp.stack([jnp.tile(cos, (B, 1)), jnp.tile(sin, (B, 1))])  # (2, B*S, Dh)

    # rotate_half (with sign) as a constant matmul operand, tiled per head.
    idx = jnp.arange(HALF)
    rotm = jnp.zeros((HEAD_DIM, HEAD_DIM), jnp.float32)
    rotm = rotm.at[idx + HALF, idx].set(-1.0)
    rotm = rotm.at[idx, idx + HALF].set(1.0)
    rotm = jnp.broadcast_to(rotm[None], (N_HEADS, HEAD_DIM, HEAD_DIM))

    # additive block-diagonal causal mask over the folded batch axis,
    # pre-tiled to the grouped-query row layout (GROUP*T, T).
    r = jnp.arange(T)
    c = jnp.arange(T)
    keep = ((r[:, None] // S) == (c[None, :] // S)) & \
           ((r[:, None] % S) >= (c[None, :] % S))
    bias = jnp.where(keep, 0.0, -1e30).astype(jnp.float32)
    bias = jnp.tile(bias, (GROUP, 1))                                 # (GROUP*T, T)

    out = pl.pallas_call(
        gemma2_block_kernel,
        out_shape=jax.ShapeDtypeStruct((T, HIDDEN), x.dtype),
    )(x.reshape(T, HIDDEN), norms, wqkv3, wo, wgu, wd, rope, rotm, bias)
    return out.reshape(B, S, HIDDEN)


# --------------------------- pure-JAX reference -------------------------------
def reference_block(x, params, cos, sin):
    n1, n2, n3, n4, wqkv, wo, wg, wu, wd = params

    def rms(t, w):
        var = jnp.mean(t * t, axis=-1, keepdims=True)
        return t * jax.lax.rsqrt(var + RMS_EPS) * (1.0 + w)

    def rope(t):  # t: (B, S, H, D)
        half = HEAD_DIM // 2
        rot = jnp.concatenate([-t[..., half:], t[..., :half]], axis=-1)
        return t * cos[None, :, None, :] + rot * sin[None, :, None, :]

    res = x
    h = rms(x, n1[0])
    qkv = jnp.einsum('bsh,ho->bso', h, wqkv)
    q = qkv[..., : N_HEADS * HEAD_DIM].reshape(B, S, N_HEADS, HEAD_DIM)
    k = qkv[..., N_HEADS * HEAD_DIM:(N_HEADS + N_KV_HEADS) * HEAD_DIM].reshape(
        B, S, N_KV_HEADS, HEAD_DIM)
    v = qkv[..., (N_HEADS + N_KV_HEADS) * HEAD_DIM:].reshape(
        B, S, N_KV_HEADS, HEAD_DIM)
    q, k = rope(q), rope(k)
    k = jnp.repeat(k, N_HEADS // N_KV_HEADS, axis=2)
    v = jnp.repeat(v, N_HEADS // N_KV_HEADS, axis=2)
    s = jnp.einsum('bqhd,bkhd->bhqk', q, k) * SCALE
    s = ATTN_SOFTCAP * jnp.tanh(s / ATTN_SOFTCAP)
    causal = jnp.tril(jnp.ones((S, S), dtype=bool))
    s = jnp.where(causal[None, None], s, -1e30)
    p = jax.nn.softmax(s, axis=-1)
    o = jnp.einsum('bhqk,bkhd->bqhd', p, v).reshape(B, S, N_HEADS * HEAD_DIM)
    o = jnp.einsum('bso,oh->bsh', o, wo)
    h = res + rms(o, n2[0])
    res = h
    hn = rms(h, n3[0])
    gate = jnp.einsum('bsh,hi->bsi', hn, wg)
    up = jnp.einsum('bsh,hi->bsi', hn, wu)
    act = 0.5 * gate * (1.0 + jnp.tanh(0.7978845608028654 *
                                       (gate + 0.044715 * gate ** 3))) * up
    mlp = jnp.einsum('bsi,ih->bsh', act, wd)
    return res + rms(mlp, n4[0])


# ------------------------------- main -----------------------------------------
if __name__ == "__main__":
    key = jax.random.PRNGKey(0)
    keys = jax.random.split(key, 11)

    x = jax.random.normal(keys[0], (B, S, HIDDEN), dtype=jnp.float32)

    # deterministic "checkpoint": small random weights, Gemma-style zero-centered norms
    n1 = 0.1 * jax.random.normal(keys[1], (1, HIDDEN), dtype=jnp.float32)
    n2 = 0.1 * jax.random.normal(keys[2], (1, HIDDEN), dtype=jnp.float32)
    n3 = 0.1 * jax.random.normal(keys[3], (1, HIDDEN), dtype=jnp.float32)
    n4 = 0.1 * jax.random.normal(keys[4], (1, HIDDEN), dtype=jnp.float32)
    wqkv = 0.05 * jax.random.normal(keys[5], (HIDDEN, QKV_OUT), dtype=jnp.float32)
    wo = 0.05 * jax.random.normal(keys[6], (N_HEADS * HEAD_DIM, HIDDEN), dtype=jnp.float32)
    wg = 0.05 * jax.random.normal(keys[7], (HIDDEN, INTER), dtype=jnp.float32)
    wu = 0.05 * jax.random.normal(keys[8], (HIDDEN, INTER), dtype=jnp.float32)
    wd = 0.05 * jax.random.normal(keys[9], (INTER, HIDDEN), dtype=jnp.float32)
    params = (n1, n2, n3, n4, wqkv, wo, wg, wu, wd)

    # RoPE tables (partial_rotary_factor = 1.0 -> full head_dim rotation)
    inv_freq = 1.0 / (ROPE_THETA ** (jnp.arange(0, HEAD_DIM, 2, dtype=jnp.float32) / HEAD_DIM))
    pos = jnp.arange(S, dtype=jnp.float32)
    freqs = jnp.outer(pos, inv_freq)                      # (S, HEAD_DIM/2)
    emb = jnp.concatenate([freqs, freqs], axis=-1)        # (S, HEAD_DIM)
    cos, sin = jnp.cos(emb), jnp.sin(emb)

    out = jax.block_until_ready(gemma2_block(x, params, cos, sin))
    ref = jax.block_until_ready(reference_block(x, params, cos, sin))

    assert out.shape == (B, S, HIDDEN)
    assert bool(jnp.all(jnp.isfinite(out)))
    assert bool(jnp.allclose(out, ref, rtol=2e-2, atol=2e-2)), \
        f"max abs diff {float(jnp.max(jnp.abs(out - ref)))}"
    print("KERNEL_OK")
</pallas_src>

<mosaic_0001>
module attributes {stable_mosaic.version = 11 : i64} {
  func.func @gemma2_block_kernel(%arg0: memref<16x32xf32, #tpu.memory_space<vmem>>, %arg1: memref<4x32xf32, #tpu.memory_space<vmem>>, %arg2: memref<8x32x8xf32, #tpu.memory_space<vmem>>, %arg3: memref<32x32xf32, #tpu.memory_space<vmem>>, %arg4: memref<32x128xf32, #tpu.memory_space<vmem>>, %arg5: memref<64x32xf32, #tpu.memory_space<vmem>>, %arg6: memref<2x16x8xf32, #tpu.memory_space<vmem>>, %arg7: memref<4x8x8xf32, #tpu.memory_space<vmem>>, %arg8: memref<32x16xf32, #tpu.memory_space<vmem>>, %arg9: memref<16x32xf32, #tpu.memory_space<vmem>>) attributes {dimension_semantics = [], scalar_prefetch = 0 : i64, scratch_operands = 0 : i64, tpu.core_type = #tpu.core_type<tc>} {
    %c0 = arith.constant 0 : index
    %c0_0 = arith.constant 0 : index
    %0 = vector.load %arg0[%c0, %c0_0] : memref<16x32xf32, #tpu.memory_space<vmem>>, vector<16x32xf32>
    %c0_1 = arith.constant 0 : index
    %c0_2 = arith.constant 0 : index
    %1 = vector.load %arg1[%c0_1, %c0_2] : memref<4x32xf32, #tpu.memory_space<vmem>>, vector<4x32xf32>
    %2 = vector.extract_strided_slice %1 {offsets = [0, 0], sizes = [1, 32], strides = [1, 1]} : vector<4x32xf32> to vector<1x32xf32>
    %3 = vector.shape_cast %2 : vector<1x32xf32> to vector<32xf32>
    %4 = arith.mulf %0, %0 : vector<16x32xf32>
    %cst = arith.constant dense<0.000000e+00> : vector<16xf32>
    %5 = vector.multi_reduction <add>, %4, %cst [1] : vector<16x32xf32> to vector<16xf32>
    %6 = vector.shape_cast %5 : vector<16xf32> to vector<16x1xf32>
    %cst_3 = arith.constant 3.200000e+01 : f32
    %7 = vector.broadcast %cst_3 : f32 to vector<16x1xf32>
    %8 = arith.divf %6, %7 : vector<16x1xf32>
    %cst_4 = arith.constant 9.99999997E-7 : f32
    %9 = vector.broadcast %cst_4 : f32 to vector<16x1xf32>
    %10 = arith.addf %8, %9 : vector<16x1xf32>
    %11 = math.rsqrt %10 : vector<16x1xf32>
    %12 = vector.broadcast %11 : vector<16x1xf32> to vector<16x32xf32>
    %13 = arith.mulf %0, %12 : vector<16x32xf32>
    %cst_5 = arith.constant 1.000000e+00 : f32
    %14 = vector.broadcast %cst_5 : f32 to vector<32xf32>
    %15 = arith.addf %14, %3 : vector<32xf32>
    %16 = vector.shape_cast %15 : vector<32xf32> to vector<1x32xf32>
    %17 = vector.broadcast %16 : vector<1x32xf32> to vector<16x32xf32>
    %18 = arith.mulf %13, %17 : vector<16x32xf32>
    %19 = vector.shape_cast %18 : vector<16x32xf32> to vector<1x16x32xf32>
    %20 = vector.shape_cast %19 : vector<1x16x32xf32> to vector<1x16x32xf32>
    %21 = vector.broadcast %20 : vector<1x16x32xf32> to vector<4x16x32xf32>
    %c0_6 = arith.constant 0 : index
    %c0_7 = arith.constant 0 : index
    %c0_8 = arith.constant 0 : index
    %22 = vector.load %arg2[%c0_6, %c0_7, %c0_8] : memref<8x32x8xf32, #tpu.memory_space<vmem>>, vector<4x32x8xf32>
    %c4 = arith.constant 4 : index
    %c0_9 = arith.constant 0 : index
    %c0_10 = arith.constant 0 : index
    %23 = vector.load %arg2[%c4, %c0_9, %c0_10] : memref<8x32x8xf32, #tpu.memory_space<vmem>>, vector<2x32x8xf32>
    %c6 = arith.constant 6 : index
    %c0_11 = arith.constant 0 : index
    %c0_12 = arith.constant 0 : index
    %24 = vector.load %arg2[%c6, %c0_11, %c0_12] : memref<8x32x8xf32, #tpu.memory_space<vmem>>, vector<2x32x8xf32>
    "tpu.trace_start"() <{level = 10 : i32, message = "htd,hdk->htk"}> : () -> ()
    %cst_13 = arith.constant dense<0.000000e+00> : vector<4x16x8xf32>
    %25 = tpu.matmul %21, %22, %cst_13 {dimension_numbers = #tpu.dot_dimension_numbers<[2], [1], [1], [2], [0, 0, 0, 1, 1, 2], [0], [0]>} : vector<4x16x32xf32>, vector<4x32x8xf32>, vector<4x16x8xf32> -> vector<4x16x8xf32>
    "tpu.trace_stop"() : () -> ()
    %26 = vector.extract_strided_slice %21 {offsets = [0, 0, 0], sizes = [2, 16, 32], strides = [1, 1, 1]} : vector<4x16x32xf32> to vector<2x16x32xf32>
    "tpu.trace_start"() <{level = 10 : i32, message = "htd,hdk->htk"}> : () -> ()
    %cst_14 = arith.constant dense<0.000000e+00> : vector<2x16x8xf32>
    %27 = tpu.matmul %26, %23, %cst_14 {dimension_numbers = #tpu.dot_dimension_numbers<[2], [1], [1], [2], [0, 0, 0, 1, 1, 2], [0], [0]>} : vector<2x16x32xf32>, vector<2x32x8xf32>, vector<2x16x8xf32> -> vector<2x16x8xf32>
    "tpu.trace_stop"() : () -> ()
    %28 = vector.extract_strided_slice %21 {offsets = [0, 0, 0], sizes = [2, 16, 32], strides = [1, 1, 1]} : vector<4x16x32xf32> to vector<2x16x32xf32>
    "tpu.trace_start"() <{level = 10 : i32, message = "htd,hdk->htk"}> : () -> ()
    %cst_15 = arith.constant dense<0.000000e+00> : vector<2x16x8xf32>
    %29 = tpu.matmul %28, %24, %cst_15 {dimension_numbers = #tpu.dot_dimension_numbers<[2], [1], [1], [2], [0, 0, 0, 1, 1, 2], [0], [0]>} : vector<2x16x32xf32>, vector<2x32x8xf32>, vector<2x16x8xf32> -> vector<2x16x8xf32>
    "tpu.trace_stop"() : () -> ()
    %c0_16 = arith.constant 0 : index
    %c0_17 = arith.constant 0 : index
    %c0_18 = arith.constant 0 : index
    %30 = vector.load %arg6[%c0_16, %c0_17, %c0_18] : memref<2x16x8xf32, #tpu.memory_space<vmem>>, vector<1x16x8xf32>
    %31 = vector.shape_cast %30 : vector<1x16x8xf32> to vector<16x8xf32>
    %c1 = arith.constant 1 : index
    %c0_19 = arith.constant 0 : index
    %c0_20 = arith.constant 0 : index
    %32 = vector.load %arg6[%c1, %c0_19, %c0_20] : memref<2x16x8xf32, #tpu.memory_space<vmem>>, vector<1x16x8xf32>
    %33 = vector.shape_cast %32 : vector<1x16x8xf32> to vector<16x8xf32>
    %c0_21 = arith.constant 0 : index
    %c0_22 = arith.constant 0 : index
    %c0_23 = arith.constant 0 : index
    %34 = vector.load %arg7[%c0_21, %c0_22, %c0_23] : memref<4x8x8xf32, #tpu.memory_space<vmem>>, vector<4x8x8xf32>
    "tpu.trace_start"() <{level = 10 : i32, message = "htd,hde->hte"}> : () -> ()
    %cst_24 = arith.constant dense<0.000000e+00> : vector<4x16x8xf32>
    %35 = tpu.matmul %25, %34, %cst_24 {dimension_numbers = #tpu.dot_dimension_numbers<[2], [1], [1], [2], [0, 0, 0, 1, 1, 2], [0], [0]>} : vector<4x16x8xf32>, vector<4x8x8xf32>, vector<4x16x8xf32> -> vector<4x16x8xf32>
    "tpu.trace_stop"() : () -> ()
    %36 = vector.shape_cast %31 : vector<16x8xf32> to vector<1x16x8xf32>
    %37 = vector.broadcast %36 : vector<1x16x8xf32> to vector<4x16x8xf32>
    %38 = arith.mulf %25, %37 : vector<4x16x8xf32>
    %39 = vector.shape_cast %33 : vector<16x8xf32> to vector<1x16x8xf32>
    %40 = vector.broadcast %39 : vector<1x16x8xf32> to vector<4x16x8xf32>
    %41 = arith.mulf %35, %40 : vector<4x16x8xf32>
    %42 = arith.addf %38, %41 : vector<4x16x8xf32>
    %43 = vector.extract_strided_slice %34 {offsets = [0, 0, 0], sizes = [2, 8, 8], strides = [1, 1, 1]} : vector<4x8x8xf32> to vector<2x8x8xf32>
    "tpu.trace_start"() <{level = 10 : i32, message = "htd,hde->hte"}> : () -> ()
    %cst_25 = arith.constant dense<0.000000e+00> : vector<2x16x8xf32>
    %44 = tpu.matmul %27, %43, %cst_25 {dimension_numbers = #tpu.dot_dimension_numbers<[2], [1], [1], [2], [0, 0, 0, 1, 1, 2], [0], [0]>} : vector<2x16x8xf32>, vector<2x8x8xf32>, vector<2x16x8xf32> -> vector<2x16x8xf32>
    "tpu.trace_stop"() : () -> ()
    %45 = vector.shape_cast %31 : vector<16x8xf32> to vector<1x16x8xf32>
    %46 = vector.broadcast %45 : vector<1x16x8xf32> to vector<2x16x8xf32>
    %47 = arith.mulf %27, %46 : vector<2x16x8xf32>
    %48 = vector.shape_cast %33 : vector<16x8xf32> to vector<1x16x8xf32>
    %49 = vector.broadcast %48 : vector<1x16x8xf32> to vector<2x16x8xf32>
    %50 = arith.mulf %44, %49 : vector<2x16x8xf32>
    %51 = arith.addf %47, %50 : vector<2x16x8xf32>
    %52 = vector.extract_strided_slice %42 {offsets = [0, 0, 0], sizes = [1, 16, 8], strides = [1, 1, 1]} : vector<4x16x8xf32> to vector<1x16x8xf32>
    %53 = vector.extract_strided_slice %42 {offsets = [1, 0, 0], sizes = [1, 16, 8], strides = [1, 1, 1]} : vector<4x16x8xf32> to vector<1x16x8xf32>
    %54 = tpu.concatenate %52, %53 in 1 : vector<1x16x8xf32>, vector<1x16x8xf32> -> vector<1x32x8xf32>
    %55 = vector.extract_strided_slice %42 {offsets = [2, 0, 0], sizes = [1, 16, 8], strides = [1, 1, 1]} : vector<4x16x8xf32> to vector<1x16x8xf32>
    %56 = vector.extract_strided_slice %42 {offsets = [3, 0, 0], sizes = [1, 16, 8], strides = [1, 1, 1]} : vector<4x16x8xf32> to vector<1x16x8xf32>
    %57 = tpu.concatenate %55, %56 in 1 : vector<1x16x8xf32>, vector<1x16x8xf32> -> vector<1x32x8xf32>
    %58 = tpu.concatenate %54, %57 in 0 : vector<1x32x8xf32>, vector<1x32x8xf32> -> vector<2x32x8xf32>
    "tpu.trace_start"() <{level = 10 : i32, message = "gqd,gkd->gqk"}> : () -> ()
    %cst_26 = arith.constant dense<0.000000e+00> : vector<2x32x16xf32>
    %59 = tpu.matmul %58, %51, %cst_26 {dimension_numbers = #tpu.dot_dimension_numbers<[2], [2], [1], [1], [0, 0, 0, 1, 1, 1], [0], [0]>} : vector<2x32x8xf32>, vector<2x16x8xf32>, vector<2x32x16xf32> -> vector<2x32x16xf32>
    "tpu.trace_stop"() : () -> ()
    %cst_27 = arith.constant 0.00707106758 : f32
    %60 = vector.broadcast %cst_27 : f32 to vector<2x32x16xf32>
    %61 = arith.mulf %59, %60 : vector<2x32x16xf32>
    %62 = math.tanh %61 : vector<2x32x16xf32>
    %cst_28 = arith.constant 5.000000e+01 : f32
    %63 = vector.broadcast %cst_28 : f32 to vector<2x32x16xf32>
    %64 = arith.mulf %63, %62 : vector<2x32x16xf32>
    %c0_29 = arith.constant 0 : index
    %c0_30 = arith.constant 0 : index
    %65 = vector.load %arg8[%c0_29, %c0_30] : memref<32x16xf32, #tpu.memory_space<vmem>>, vector<32x16xf32>
    %66 = vector.shape_cast %65 : vector<32x16xf32> to vector<1x32x16xf32>
    %67 = vector.broadcast %66 : vector<1x32x16xf32> to vector<2x32x16xf32>
    %68 = arith.addf %64, %67 : vector<2x32x16xf32>
    %cst_31 = arith.constant dense<0xFF800000> : vector<2x32xf32>
    %69 = vector.multi_reduction <maximumf>, %68, %cst_31 [2] : vector<2x32x16xf32> to vector<2x32xf32>
    %70 = vector.shape_cast %69 : vector<2x32xf32> to vector<2x32x1xf32>
    %71 = vector.broadcast %70 : vector<2x32x1xf32> to vector<2x32x16xf32>
    %72 = arith.subf %68, %71 : vector<2x32x16xf32>
    %73 = math.exp %72 : vector<2x32x16xf32>
    %cst_32 = arith.constant dense<0.000000e+00> : vector<2x32xf32>
    %74 = vector.multi_reduction <add>, %73, %cst_32 [2] : vector<2x32x16xf32> to vector<2x32xf32>
    %75 = vector.shape_cast %74 : vector<2x32xf32> to vector<2x32x1xf32>
    %76 = tpu.reciprocal %75 {approx = true} : vector<2x32x1xf32> -> vector<2x32x1xf32>
    %77 = vector.broadcast %76 : vector<2x32x1xf32> to vector<2x32x16xf32>
    %78 = arith.mulf %73, %77 : vector<2x32x16xf32>
    "tpu.trace_start"() <{level = 10 : i32, message = "gqk,gkd->gqd"}> : () -> ()
    %cst_33 = arith.constant dense<0.000000e+00> : vector<2x32x8xf32>
    %79 = tpu.matmul %78, %29, %cst_33 {dimension_numbers = #tpu.dot_dimension_numbers<[2], [1], [1], [2], [0, 0, 0, 1, 1, 2], [0], [0]>} : vector<2x32x16xf32>, vector<2x16x8xf32>, vector<2x32x8xf32> -> vector<2x32x8xf32>
    "tpu.trace_stop"() : () -> ()
    %80 = vector.extract_strided_slice %79 {offsets = [0, 0, 0], sizes = [1, 16, 8], strides = [1, 1, 1]} : vector<2x32x8xf32> to vector<1x16x8xf32>
    %81 = vector.shape_cast %80 : vector<1x16x8xf32> to vector<16x8xf32>
    %82 = vector.extract_strided_slice %79 {offsets = [0, 16, 0], sizes = [1, 16, 8], strides = [1, 1, 1]} : vector<2x32x8xf32> to vector<1x16x8xf32>
    %83 = vector.shape_cast %82 : vector<1x16x8xf32> to vector<16x8xf32>
    %84 = vector.extract_strided_slice %79 {offsets = [1, 0, 0], sizes = [1, 16, 8], strides = [1, 1, 1]} : vector<2x32x8xf32> to vector<1x16x8xf32>
    %85 = vector.shape_cast %84 : vector<1x16x8xf32> to vector<16x8xf32>
    %86 = vector.extract_strided_slice %79 {offsets = [1, 16, 0], sizes = [1, 16, 8], strides = [1, 1, 1]} : vector<2x32x8xf32> to vector<1x16x8xf32>
    %87 = vector.shape_cast %86 : vector<1x16x8xf32> to vector<16x8xf32>
    %88 = tpu.concatenate %81, %83, %85, %87 in 1 : vector<16x8xf32>, vector<16x8xf32>, vector<16x8xf32>, vector<16x8xf32> -> vector<16x32xf32>
    %c0_34 = arith.constant 0 : index
    %c0_35 = arith.constant 0 : index
    %89 = vector.load %arg3[%c0_34, %c0_35] : memref<32x32xf32, #tpu.memory_space<vmem>>, vector<32x32xf32>
    %cst_36 = arith.constant dense<0.000000e+00> : vector<16x32xf32>
    %90 = tpu.matmul %88, %89, %cst_36 {dimension_numbers = #tpu.dot_dimension_numbers<[1], [0], [0], [1], [0, 0, 1, 1], [], []>} : vector<16x32xf32>, vector<32x32xf32>, vector<16x32xf32> -> vector<16x32xf32>
    %91 = vector.extract_strided_slice %1 {offsets = [1, 0], sizes = [1, 32], strides = [1, 1]} : vector<4x32xf32> to vector<1x32xf32>
    %92 = vector.shape_cast %91 : vector<1x32xf32> to vector<32xf32>
    %93 = arith.mulf %90, %90 : vector<16x32xf32>
    %cst_37 = arith.constant dense<0.000000e+00> : vector<16xf32>
    %94 = vector.multi_reduction <add>, %93, %cst_37 [1] : vector<16x32xf32> to vector<16xf32>
    %95 = vector.shape_cast %94 : vector<16xf32> to vector<16x1xf32>
    %cst_38 = arith.constant 3.200000e+01 : f32
    %96 = vector.broadcast %cst_38 : f32 to vector<16x1xf32>
    %97 = arith.divf %95, %96 : vector<16x1xf32>
    %cst_39 = arith.constant 9.99999997E-7 : f32
    %98 = vector.broadcast %cst_39 : f32 to vector<16x1xf32>
    %99 = arith.addf %97, %98 : vector<16x1xf32>
    %100 = math.rsqrt %99 : vector<16x1xf32>
    %101 = vector.broadcast %100 : vector<16x1xf32> to vector<16x32xf32>
    %102 = arith.mulf %90, %101 : vector<16x32xf32>
    %cst_40 = arith.constant 1.000000e+00 : f32
    %103 = vector.broadcast %cst_40 : f32 to vector<32xf32>
    %104 = arith.addf %103, %92 : vector<32xf32>
    %105 = vector.shape_cast %104 : vector<32xf32> to vector<1x32xf32>
    %106 = vector.broadcast %105 : vector<1x32xf32> to vector<16x32xf32>
    %107 = arith.mulf %102, %106 : vector<16x32xf32>
    %108 = arith.addf %0, %107 : vector<16x32xf32>
    %109 = vector.extract_strided_slice %1 {offsets = [2, 0], sizes = [1, 32], strides = [1, 1]} : vector<4x32xf32> to vector<1x32xf32>
    %110 = vector.shape_cast %109 : vector<1x32xf32> to vector<32xf32>
    %111 = arith.mulf %108, %108 : vector<16x32xf32>
    %cst_41 = arith.constant dense<0.000000e+00> : vector<16xf32>
    %112 = vector.multi_reduction <add>, %111, %cst_41 [1] : vector<16x32xf32> to vector<16xf32>
    %113 = vector.shape_cast %112 : vector<16xf32> to vector<16x1xf32>
    %cst_42 = arith.constant 3.200000e+01 : f32
    %114 = vector.broadcast %cst_42 : f32 to vector<16x1xf32>
    %115 = arith.divf %113, %114 : vector<16x1xf32>
    %cst_43 = arith.constant 9.99999997E-7 : f32
    %116 = vector.broadcast %cst_43 : f32 to vector<16x1xf32>
    %117 = arith.addf %115, %116 : vector<16x1xf32>
    %118 = math.rsqrt %117 : vector<16x1xf32>
    %119 = vector.broadcast %118 : vector<16x1xf32> to vector<16x32xf32>
    %120 = arith.mulf %108, %119 : vector<16x32xf32>
    %cst_44 = arith.constant 1.000000e+00 : f32
    %121 = vector.broadcast %cst_44 : f32 to vector<32xf32>
    %122 = arith.addf %121, %110 : vector<32xf32>
    %123 = vector.shape_cast %122 : vector<32xf32> to vector<1x32xf32>
    %124 = vector.broadcast %123 : vector<1x32xf32> to vector<16x32xf32>
    %125 = arith.mulf %120, %124 : vector<16x32xf32>
    %c0_45 = arith.constant 0 : index
    %c0_46 = arith.constant 0 : index
    %126 = vector.load %arg4[%c0_45, %c0_46] : memref<32x128xf32, #tpu.memory_space<vmem>>, vector<32x128xf32>
    %cst_47 = arith.constant dense<0.000000e+00> : vector<16x128xf32>
    %127 = tpu.matmul %125, %126, %cst_47 {dimension_numbers = #tpu.dot_dimension_numbers<[1], [0], [0], [1], [0, 0, 1, 1], [], []>} : vector<16x32xf32>, vector<32x128xf32>, vector<16x128xf32> -> vector<16x128xf32>
    %128 = vector.extract_strided_slice %127 {offsets = [0, 0], sizes = [16, 64], strides = [1, 1]} : vector<16x128xf32> to vector<16x64xf32>
    %129 = vector.extract_strided_slice %127 {offsets = [0, 64], sizes = [16, 64], strides = [1, 1]} : vector<16x128xf32> to vector<16x64xf32>
    %cst_48 = arith.constant 5.000000e-01 : f32
    %130 = vector.broadcast %cst_48 : f32 to vector<16x64xf32>
    %131 = arith.mulf %130, %128 : vector<16x64xf32>
    %cst_49 = arith.constant 4.471500e-02 : f32
    %132 = vector.broadcast %cst_49 : f32 to vector<16x64xf32>
    %133 = arith.mulf %132, %128 : vector<16x64xf32>
    %134 = arith.mulf %133, %128 : vector<16x64xf32>
    %135 = arith.mulf %134, %128 : vector<16x64xf32>
    %136 = arith.addf %128, %135 : vector<16x64xf32>
    %cst_50 = arith.constant 0.797884583 : f32
    %137 = vector.broadcast %cst_50 : f32 to vector<16x64xf32>
    %138 = arith.mulf %137, %136 : vector<16x64xf32>
    %139 = math.tanh %138 : vector<16x64xf32>
    %cst_51 = arith.constant 1.000000e+00 : f32
    %140 = vector.broadcast %cst_51 : f32 to vector<16x64xf32>
    %141 = arith.addf %140, %139 : vector<16x64xf32>
    %142 = arith.mulf %131, %141 : vector<16x64xf32>
    %143 = arith.mulf %142, %129 : vector<16x64xf32>
    %c0_52 = arith.constant 0 : index
    %c0_53 = arith.constant 0 : index
    %144 = vector.load %arg5[%c0_52, %c0_53] : memref<64x32xf32, #tpu.memory_space<vmem>>, vector<64x32xf32>
    %cst_54 = arith.constant dense<0.000000e+00> : vector<16x32xf32>
    %145 = tpu.matmul %143, %144, %cst_54 {dimension_numbers = #tpu.dot_dimension_numbers<[1], [0], [0], [1], [0, 0, 1, 1], [], []>} : vector<16x64xf32>, vector<64x32xf32>, vector<16x32xf32> -> vector<16x32xf32>
    %146 = vector.extract_strided_slice %1 {offsets = [3, 0], sizes = [1, 32], strides = [1, 1]} : vector<4x32xf32> to vector<1x32xf32>
    %147 = vector.shape_cast %146 : vector<1x32xf32> to vector<32xf32>
    %148 = arith.mulf %145, %145 : vector<16x32xf32>
    %cst_55 = arith.constant dense<0.000000e+00> : vector<16xf32>
    %149 = vector.multi_reduction <add>, %148, %cst_55 [1] : vector<16x32xf32> to vector<16xf32>
    %150 = vector.shape_cast %149 : vector<16xf32> to vector<16x1xf32>
    %cst_56 = arith.constant 3.200000e+01 : f32
    %151 = vector.broadcast %cst_56 : f32 to vector<16x1xf32>
    %152 = arith.divf %150, %151 : vector<16x1xf32>
    %cst_57 = arith.constant 9.99999997E-7 : f32
    %153 = vector.broadcast %cst_57 : f32 to vector<16x1xf32>
    %154 = arith.addf %152, %153 : vector<16x1xf32>
    %155 = math.rsqrt %154 : vector<16x1xf32>
    %156 = vector.broadcast %155 : vector<16x1xf32> to vector<16x32xf32>
    %157 = arith.mulf %145, %156 : vector<16x32xf32>
    %cst_58 = arith.constant 1.000000e+00 : f32
    %158 = vector.broadcast %cst_58 : f32 to vector<32xf32>
    %159 = arith.addf %158, %147 : vector<32xf32>
    %160 = vector.shape_cast %159 : vector<32xf32> to vector<1x32xf32>
    %161 = vector.broadcast %160 : vector<1x32xf32> to vector<16x32xf32>
    %162 = arith.mulf %157, %161 : vector<16x32xf32>
    %163 = arith.addf %108, %162 : vector<16x32xf32>
    %c0_59 = arith.constant 0 : index
    %c0_60 = arith.constant 0 : index
    %164 = vector.load %arg9[%c0_59, %c0_60] : memref<16x32xf32, #tpu.memory_space<vmem>>, vector<16x32xf32>
    tpu.vector_store %arg9[%c0_59, %c0_60], %163 {strides = array<i32>} : memref<16x32xf32, #tpu.memory_space<vmem>>, vector<16x32xf32>,
    return
  }
}

</mosaic_0001>

<llo_original>
// kernel: tpu_custom_call.1
$region0: #{tpu_custom_call.1}
  #allocation0 [shape = 'u32[]', space=smem, size = 0x4, offset = 0x4, fixed_abs, tag = 'smem constant byte address 0x4 - core index']
  #allocation1 [shape = 'u32[144,128]{1,0:T(1,128)}', space=vmem, size = 0x12000, scoped, tag = 'internal scratch']
  %s0 = inlined_call_operand.vmem [shape: f32[16,32], index: 0, kind: input, shape index: {}]
  %s1 = inlined_call_operand.vmem [shape: f32[4,32], index: 1, kind: input, shape index: {}]
  %s2 = inlined_call_operand.vmem [shape: f32[8,32,8], index: 2, kind: input, shape index: {}]
  %s3 = inlined_call_operand.vmem [shape: f32[32,32], index: 3, kind: input, shape index: {}]
  %s4 = inlined_call_operand.vmem [shape: f32[32,128], index: 4, kind: input, shape index: {}]
  %s5 = inlined_call_operand.vmem [shape: f32[64,32], index: 5, kind: input, shape index: {}]
  %s6 = inlined_call_operand.vmem [shape: f32[2,16,8], index: 6, kind: input, shape index: {}]
  %s7 = inlined_call_operand.vmem [shape: f32[4,8,8], index: 7, kind: input, shape index: {}]
  %s8 = inlined_call_operand.vmem [shape: f32[32,16], index: 8, kind: input, shape index: {}]
  %s9 = inlined_call_operand.hbm [shape: f32[16,32], index: 9, kind: output, shape index: {}]
  %s10 = sld [smem:[#allocation0]]
  $region46: #{tpu_custom_call.1} parent=0
    _
  %s12 = ssub.s32 1, %s10
  %s13 = scalar_select 0, %s12, %s10
  $region1: #{tpu_custom_call.1} parent=0
    #allocation2 [shape = 'u8[8192]{0}', space=vmem, size = 0x2000, scoped, tag = 'output window, operand 0, single buffered']
    #allocation3 [shape = 's32[1]{0}', space=sflag, size = 0x4, scoped, tag = 'scoped memory for tpu_custom_call.1']
    %14 = vsyncpa [#allocation3], 0
    // Predicated region
    $region2: #{tpu_custom_call.1} parent=1 // pred_check
      _
    $region3: #{tpu_custom_call.1} parent=1 // pred_check_branch
      %16 = sbr.rel (0) target = $region5
    $region4: #{tpu_custom_call.1} parent=1 // pred_region
      _
    $region5: #{tpu_custom_call.1} parent=1 // pred_fallthru
      _
    // Predicated region
    $region6: #{tpu_custom_call.1} parent=1 // pred_check
      _
    $region7: #{tpu_custom_call.1} parent=1 // pred_check_branch
      %18 = sbr.rel (0) target = $region9
    $region8: #{tpu_custom_call.1} parent=1 // pred_region
      _
    $region9: #{tpu_custom_call.1} parent=1 // pred_fallthru
      _
    // Predicated region
    $region10: #{tpu_custom_call.1} parent=1 // pred_check
      _
    $region11: #{tpu_custom_call.1} parent=1 // pred_check_branch
      %20 = sbr.rel (0) target = $region13
    $region12: #{tpu_custom_call.1} parent=1 // pred_region
      _
    $region13: #{tpu_custom_call.1} parent=1 // pred_fallthru
      _
    // Predicated region
    $region14: #{tpu_custom_call.1} parent=1 // pred_check
      _
    $region15: #{tpu_custom_call.1} parent=1 // pred_check_branch
      %22 = sbr.rel (0) target = $region17
    $region16: #{tpu_custom_call.1} parent=1 // pred_region
      _
    $region17: #{tpu_custom_call.1} parent=1 // pred_fallthru
      _
    // Predicated region
    $region18: #{tpu_custom_call.1} parent=1 // pred_check
      _
    $region19: #{tpu_custom_call.1} parent=1 // pred_check_branch
      %24 = sbr.rel (0) target = $region21
    $region20: #{tpu_custom_call.1} parent=1 // pred_region
      _
    $region21: #{tpu_custom_call.1} parent=1 // pred_fallthru
      _
    // Predicated region
    $region22: #{tpu_custom_call.1} parent=1 // pred_check
      _
    $region23: #{tpu_custom_call.1} parent=1 // pred_check_branch
      %26 = sbr.rel (0) target = $region25
    $region24: #{tpu_custom_call.1} parent=1 // pred_region
      _
    $region25: #{tpu_custom_call.1} parent=1 // pred_fallthru
      _
    // Predicated region
    $region26: #{tpu_custom_call.1} parent=1 // pred_check
      _
    $region27: #{tpu_custom_call.1} parent=1 // pred_check_branch
      %28 = sbr.rel (0) target = $region29
    $region28: #{tpu_custom_call.1} parent=1 // pred_region
      _
    $region29: #{tpu_custom_call.1} parent=1 // pred_fallthru
      _
    // Predicated region
    $region30: #{tpu_custom_call.1} parent=1 // pred_check
      _
    $region31: #{tpu_custom_call.1} parent=1 // pred_check_branch
      %30 = sbr.rel (0) target = $region33
    $region32: #{tpu_custom_call.1} parent=1 // pred_region
      _
    $region33: #{tpu_custom_call.1} parent=1 // pred_fallthru
      _
    // Predicated region
    $region34: #{tpu_custom_call.1} parent=1 // pred_check
      _
    $region35: #{tpu_custom_call.1} parent=1 // pred_check_branch
      %32 = sbr.rel (0) target = $region37
    $region36: #{tpu_custom_call.1} parent=1 // pred_region
      _
    $region37: #{tpu_custom_call.1} parent=1 // pred_fallthru
      _
    %v33 = vld [vmem:[%s0] sm:$0xff]
    %v34 = vld [vmem:[%s0 + $0x8] sm:$0xff]
    %v35 = vld [vmem:[%s1] sm:$0xf]
    %v36 = vmul.f32 %v33, %v33
    %v37 = vmul.f32 %v34, %v34
    %vm38 = vcmask 261120
    %v39 = vsel %vm38, %v36, 0.0
    %40 = vadd.xlane.f32.xlu0 %v39
    %v41 = vpop.xlane.xlu0 %40
    %v42 = vsel %vm38, %v37, 0.0
    %43 = vadd.xlane.f32.xlu0 %v42
    %v44 = vpop.xlane.xlu0 %43
    %v45 = vrcp.pop 32.0
    %v46 = vmul.f32 %v41, %v45
    %v47 = vmul.f32 %v44, %v45
    %v48 = vadd.f32 %v46, 1e-06
    %v49 = vadd.f32 %v47, 1e-06
    %v50 = vrsqrt.pop %v48
    %v51 = vrsqrt.pop %v49
    %v52 = vmul.f32 %v33, %v50
    %v53 = vmul.f32 %v34, %v51
    %v54 = vadd.f32 %v35, 1.0
    %v55 = vlaneseq
    %v56 = vshrl.u32 %v55, 7
    %v57 = vsub.s32 0, %v56
    %v58 = vrot.slane %v54, %v57
    %v59 = vmul.f32 %v52, %v58
    %v60 = vmul.f32 %v53, %v58
    %v61 = vld [vmem:[%s2] sm:$0xff]
    %v62 = vld [vmem:[%s2 + $0x8] sm:$0xff]
    %v63 = vld [vmem:[%s2 + $0x10] sm:$0xff]
    %v64 = vld [vmem:[%s2 + $0x18] sm:$0xff]
    %v65 = vld [vmem:[%s2 + $0x20] sm:$0xff]
    %v66 = vld [vmem:[%s2 + $0x28] sm:$0xff]
    %v67 = vld [vmem:[%s2 + $0x30] sm:$0xff]
    %v68 = vld [vmem:[%s2 + $0x38] sm:$0xff]
    %v69 = vld [vmem:[%s2 + $0x40] sm:$0xff]
    %v70 = vld [vmem:[%s2 + $0x48] sm:$0xff]
    %v71 = vld [vmem:[%s2 + $0x50] sm:$0xff]
    %v72 = vld [vmem:[%s2 + $0x58] sm:$0xff]
    %v73 = vld [vmem:[%s2 + $0x60] sm:$0xff]
    %v74 = vld [vmem:[%s2 + $0x68] sm:$0xff]
    %v75 = vld [vmem:[%s2 + $0x70] sm:$0xff]
    %v76 = vld [vmem:[%s2 + $0x78] sm:$0xff]
    %s77 = scalar_lea.vmem %s2, 128
    %v78 = vld [vmem:[%s77] sm:$0xff]
    %v79 = vld [vmem:[%s77 + $0x8] sm:$0xff]
    %v80 = vld [vmem:[%s77 + $0x10] sm:$0xff]
    %v81 = vld [vmem:[%s77 + $0x18] sm:$0xff]
    %v82 = vld [vmem:[%s77 + $0x20] sm:$0xff]
    %v83 = vld [vmem:[%s77 + $0x28] sm:$0xff]
    %v84 = vld [vmem:[%s77 + $0x30] sm:$0xff]
    %v85 = vld [vmem:[%s77 + $0x38] sm:$0xff]
    %s86 = scalar_lea.vmem %s2, 192
    %v87 = vld [vmem:[%s86] sm:$0xff]
    %v88 = vld [vmem:[%s86 + $0x8] sm:$0xff]
    %v89 = vld [vmem:[%s86 + $0x10] sm:$0xff]
    %v90 = vld [vmem:[%s86 + $0x18] sm:$0xff]
    %v91 = vld [vmem:[%s86 + $0x20] sm:$0xff]
    %v92 = vld [vmem:[%s86 + $0x28] sm:$0xff]
    %v93 = vld [vmem:[%s86 + $0x30] sm:$0xff]
    %v94 = vld [vmem:[%s86 + $0x38] sm:$0xff]
    %v96 = vsel %vm38, %v59, 0
    %v99 = vsel %vm38, %v60, 0
    %101 = vmatprep.subr.mxu0 0.0
    %102 = vmatpush1.msra.mxu0 0.0
    %103 = vmatprep.subr.mxu0 0.0
    %104 = vmatpush1.msra.mxu0 0.0
    %105 = vmatprep.subr.mxu0 0.0
    %106 = vmatpush1.msra.mxu0 0.0
    %107 = vmatprep.subr.mxu0 0.0
    %108 = vmatpush1.msra.mxu0 0.0
    %109 = vmatprep.subr.mxu0 0.0
    %110 = vmatpush1.msra.mxu0 0.0
    %111 = vmatprep.subr.mxu0 0.0
    %112 = vmatpush1.msra.mxu0 0.0
    %113 = vmatprep.subr.mxu0 0.0
    %114 = vmatpush1.msra.mxu0 0.0
    %115 = vmatprep.subr.mxu0 0.0
    %116 = vmatpush1.msra.mxu0 0.0
    %117 = vmatprep.subr.mxu0 0.0
    %118 = vmatpush1.msra.mxu0 0.0
    %119 = vmatprep.subr.mxu0 0.0
    %120 = vmatpush1.msra.mxu0 0.0
    %121 = vmatprep.subr.mxu0 0.0
    %122 = vmatpush1.msra.mxu0 0.0
    %123 = vmatprep.subr.mxu0 0.0
    %124 = vmatpush1.msra.mxu0 0.0
    %125 = vmatprep.subr.mxu0 0.0
    %126 = vmatpush1.msra.mxu0 %v64
    %127 = vmatprep.subr.mxu0 0.0
    %128 = vmatpush1.msra.mxu0 %v63
    %129 = vmatprep.subr.mxu0 0.0
    %130 = vmatpush1.msra.mxu0 %v62
    %131 = vmatprep.subr.mxu0 0.0
    %132 = vmatpush1.msra.mxu0 %v61
    %133 = vmatprep.subr.mxu0 0.0
    %134 = vmatpush2.msra.mxu0 0.0
    %135 = vmatprep.subr.mxu0 0.0
    %136 = vmatpush2.msra.mxu0 0.0
    %137 = vmatprep.subr.mxu0 0.0
    %138 = vmatpush2.msra.mxu0 0.0
    %139 = vmatprep.subr.mxu0 0.0
    %140 = vmatpush2.msra.mxu0 0.0
    %141 = vmatprep.subr.mxu0 0.0
    %142 = vmatpush2.msra.mxu0 0.0
    %143 = vmatprep.subr.mxu0 0.0
    %144 = vmatpush2.msra.mxu0 0.0
    %145 = vmatprep.subr.mxu0 0.0
    %146 = vmatpush2.msra.mxu0 0.0
    %147 = vmatprep.subr.mxu0 0.0
    %148 = vmatpush2.msra.mxu0 0.0
    %149 = vmatprep.subr.mxu0 0.0
    %150 = vmatpush2.msra.mxu0 0.0
    %151 = vmatprep.subr.mxu0 0.0
    %152 = vmatpush2.msra.mxu0 0.0
    %153 = vmatprep.subr.mxu0 0.0
    %154 = vmatpush2.msra.mxu0 0.0
    %155 = vmatprep.subr.mxu0 0.0
    %156 = vmatpush2.msra.mxu0 0.0
    %157 = vmatprep.subr.mxu0 0.0
    %158 = vmatpush2.msra.mxu0 0.0
    %159 = vmatprep.subr.mxu0 0.0
    %160 = vmatpush2.msra.mxu0 0.0
    %161 = vmatprep.subr.mxu0 0.0
    %162 = vmatpush2.msra.mxu0 0.0
    %163 = vmatprep.subr.mxu0 0.0
    %164 = vmatpush2.msra.mxu0 0.0
    %165 = vmatprep.mubr.f32.mxu0 0.0
    %166 = vmatmul.mubr.f32.gmra.mxu0 %v96
    %v167 = vpop.f32.mrf.mxu0
    %v168 = vadd.f32 0.0, %v167
    %v169 = vpop.f32.mrf.mxu0
    %170 = vmatprep.mubr.f32.mxu0 0.0
    %171 = vmatmul.mubr.f32.gmra.mxu0 %v99
    %v172 = vpop.f32.mrf.mxu0
    %v173 = vadd.f32 0.0, %v172
    %v174 = vpop.f32.mrf.mxu0
    %175 = vdwg.mxu0
    %176 = vmatprep.subr.mxu0 0.0
    %177 = vmatpush1.msra.mxu0 0.0
    %178 = vmatprep.subr.mxu0 0.0
    %179 = vmatpush1.msra.mxu0 0.0
    %180 = vmatprep.subr.mxu0 0.0
    %181 = vmatpush1.msra.mxu0 0.0
    %182 = vmatprep.subr.mxu0 0.0
    %183 = vmatpush1.msra.mxu0 0.0
    %184 = vmatprep.subr.mxu0 0.0
    %185 = vmatpush1.msra.mxu0 0.0
    %186 = vmatprep.subr.mxu0 0.0
    %187 = vmatpush1.msra.mxu0 0.0
    %188 = vmatprep.subr.mxu0 0.0
    %189 = vmatpush1.msra.mxu0 0.0
    %190 = vmatprep.subr.mxu0 0.0
    %191 = vmatpush1.msra.mxu0 0.0
    %192 = vmatprep.subr.mxu0 0.0
    %193 = vmatpush1.msra.mxu0 0.0
    %194 = vmatprep.subr.mxu0 0.0
    %195 = vmatpush1.msra.mxu0 0.0
    %196 = vmatprep.subr.mxu0 0.0
    %197 = vmatpush1.msra.mxu0 0.0
    %198 = vmatprep.subr.mxu0 0.0
    %199 = vmatpush1.msra.mxu0 0.0
    %200 = vmatprep.subr.mxu0 0.0
    %201 = vmatpush1.msra.mxu0 %v68
    %202 = vmatprep.subr.mxu0 0.0
    %203 = vmatpush1.msra.mxu0 %v67
    %204 = vmatprep.subr.mxu0 0.0
    %205 = vmatpush1.msra.mxu0 %v66
    %206 = vmatprep.subr.mxu0 0.0
    %207 = vmatpush1.msra.mxu0 %v65
    %208 = vmatprep.subr.mxu0 0.0
    %209 = vmatpush2.msra.mxu0 0.0
    %210 = vmatprep.subr.mxu0 0.0
    %211 = vmatpush2.msra.mxu0 0.0
    %212 = vmatprep.subr.mxu0 0.0
    %213 = vmatpush2.msra.mxu0 0.0
    %214 = vmatprep.subr.mxu0 0.0
    %215 = vmatpush2.msra.mxu0 0.0
    %216 = vmatprep.subr.mxu0 0.0
    %217 = vmatpush2.msra.mxu0 0.0
    %218 = vmatprep.subr.mxu0 0.0
    %219 = vmatpush2.msra.mxu0 0.0
    %220 = vmatprep.subr.mxu0 0.0
    %221 = vmatpush2.msra.mxu0 0.0
    %222 = vmatprep.subr.mxu0 0.0
    %223 = vmatpush2.msra.mxu0 0.0
    %224 = vmatprep.subr.mxu0 0.0
    %225 = vmatpush2.msra.mxu0 0.0
    %226 = vmatprep.subr.mxu0 0.0
    %227 = vmatpush2.msra.mxu0 0.0
    %228 = vmatprep.subr.mxu0 0.0
    %229 = vmatpush2.msra.mxu0 0.0
    %230 = vmatprep.subr.mxu0 0.0
    %231 = vmatpush2.msra.mxu0 0.0
    %232 = vmatprep.subr.mxu0 0.0
    %233 = vmatpush2.msra.mxu0 0.0
    %234 = vmatprep.subr.mxu0 0.0
    %235 = vmatpush2.msra.mxu0 0.0
    %236 = vmatprep.subr.mxu0 0.0
    %237 = vmatpush2.msra.mxu0 0.0
    %238 = vmatprep.subr.mxu0 0.0
    %239 = vmatpush2.msra.mxu0 0.0
    %240 = vmatprep.mubr.f32.mxu0 0.0
    %241 = vmatmul.mubr.f32.gmra.mxu0 %v96
    %v242 = vpop.f32.mrf.mxu0
    %v243 = vadd.f32 0.0, %v242
    %v244 = vpop.f32.mrf.mxu0
    %245 = vmatprep.mubr.f32.mxu0 0.0
    %246 = vmatmul.mubr.f32.gmra.mxu0 %v99
    %v247 = vpop.f32.mrf.mxu0
    %v248 = vadd.f32 0.0, %v247
    %v249 = vpop.f32.mrf.mxu0
    %250 = vdwg.mxu0
    %251 = vmatprep.subr.mxu0 0.0
    %252 = vmatpush1.msra.mxu0 0.0
    %253 = vmatprep.subr.mxu0 0.0
    %254 = vmatpush1.msra.mxu0 0.0
    %255 = vmatprep.subr.mxu0 0.0
    %256 = vmatpush1.msra.mxu0 0.0
    %257 = vmatprep.subr.mxu0 0.0
    %258 = vmatpush1.msra.mxu0 0.0
    %259 = vmatprep.subr.mxu0 0.0
    %260 = vmatpush1.msra.mxu0 0.0
    %261 = vmatprep.subr.mxu0 0.0
    %262 = vmatpush1.msra.mxu0 0.0
    %263 = vmatprep.subr.mxu0 0.0
    %264 = vmatpush1.msra.mxu0 0.0
    %265 = vmatprep.subr.mxu0 0.0
    %266 = vmatpush1.msra.mxu0 0.0
    %267 = vmatprep.subr.mxu0 0.0
    %268 = vmatpush1.msra.mxu0 0.0
    %269 = vmatprep.subr.mxu0 0.0
    %270 = vmatpush1.msra.mxu0 0.0
    %271 = vmatprep.subr.mxu0 0.0
    %272 = vmatpush1.msra.mxu0 0.0
    %273 = vmatprep.subr.mxu0 0.0
    %274 = vmatpush1.msra.mxu0 0.0
    %275 = vmatprep.subr.mxu0 0.0
    %276 = vmatpush1.msra.mxu0 %v72
    %277 = vmatprep.subr.mxu0 0.0
    %278 = vmatpush1.msra.mxu0 %v71
    %279 = vmatprep.subr.mxu0 0.0
    %280 = vmatpush1.msra.mxu0 %v70
    %281 = vmatprep.subr.mxu0 0.0
    %282 = vmatpush1.msra.mxu0 %v69
    %283 = vmatprep.subr.mxu0 0.0
    %284 = vmatpush2.msra.mxu0 0.0
    %285 = vmatprep.subr.mxu0 0.0
    %286 = vmatpush2.msra.mxu0 0.0
    %287 = vmatprep.subr.mxu0 0.0
    %288 = vmatpush2.msra.mxu0 0.0
    %289 = vmatprep.subr.mxu0 0.0
    %290 = vmatpush2.msra.mxu0 0.0
    %291 = vmatprep.subr.mxu0 0.0
    %292 = vmatpush2.msra.mxu0 0.0
    %293 = vmatprep.subr.mxu0 0.0
    %294 = vmatpush2.msra.mxu0 0.0
    %295 = vmatprep.subr.mxu0 0.0
    %296 = vmatpush2.msra.mxu0 0.0
    %297 = vmatprep.subr.mxu0 0.0
    %298 = vmatpush2.msra.mxu0 0.0
    %299 = vmatprep.subr.mxu0 0.0
    %300 = vmatpush2.msra.mxu0 0.0
    %301 = vmatprep.subr.mxu0 0.0
    %302 = vmatpush2.msra.mxu0 0.0
    %303 = vmatprep.subr.mxu0 0.0
    %304 = vmatpush2.msra.mxu0 0.0
    %305 = vmatprep.subr.mxu0 0.0
    %306 = vmatpush2.msra.mxu0 0.0
    %307 = vmatprep.subr.mxu0 0.0
    %308 = vmatpush2.msra.mxu0 0.0
    %309 = vmatprep.subr.mxu0 0.0
    %310 = vmatpush2.msra.mxu0 0.0
    %311 = vmatprep.subr.mxu0 0.0
    %312 = vmatpush2.msra.mxu0 0.0
    %313 = vmatprep.subr.mxu0 0.0
    %314 = vmatpush2.msra.mxu0 0.0
    %315 = vmatprep.mubr.f32.mxu0 0.0
    %316 = vmatmul.mubr.f32.gmra.mxu0 %v96
    %v317 = vpop.f32.mrf.mxu0
    %v318 = vadd.f32 0.0, %v317
    %v319 = vpop.f32.mrf.mxu0
    %320 = vmatprep.mubr.f32.mxu0 0.0
    %321 = vmatmul.mubr.f32.gmra.mxu0 %v99
    %v322 = vpop.f32.mrf.mxu0
    %v323 = vadd.f32 0.0, %v322
    %v324 = vpop.f32.mrf.mxu0
    %325 = vdwg.mxu0
    %326 = vmatprep.subr.mxu0 0.0
    %327 = vmatpush1.msra.mxu0 0.0
    %328 = vmatprep.subr.mxu0 0.0
    %329 = vmatpush1.msra.mxu0 0.0
    %330 = vmatprep.subr.mxu0 0.0
    %331 = vmatpush1.msra.mxu0 0.0
    %332 = vmatprep.subr.mxu0 0.0
    %333 = vmatpush1.msra.mxu0 0.0
    %334 = vmatprep.subr.mxu0 0.0
    %335 = vmatpush1.msra.mxu0 0.0
    %336 = vmatprep.subr.mxu0 0.0
    %337 = vmatpush1.msra.mxu0 0.0
    %338 = vmatprep.subr.mxu0 0.0
    %339 = vmatpush1.msra.mxu0 0.0
    %340 = vmatprep.subr.mxu0 0.0
    %341 = vmatpush1.msra.mxu0 0.0
    %342 = vmatprep.subr.mxu0 0.0
    %343 = vmatpush1.msra.mxu0 0.0
    %344 = vmatprep.subr.mxu0 0.0
    %345 = vmatpush1.msra.mxu0 0.0
    %346 = vmatprep.subr.mxu0 0.0
    %347 = vmatpush1.msra.mxu0 0.0
    %348 = vmatprep.subr.mxu0 0.0
    %349 = vmatpush1.msra.mxu0 0.0
    %350 = vmatprep.subr.mxu0 0.0
    %351 = vmatpush1.msra.mxu0 %v76
    %352 = vmatprep.subr.mxu0 0.0
    %353 = vmatpush1.msra.mxu0 %v75
    %354 = vmatprep.subr.mxu0 0.0
    %355 = vmatpush1.msra.mxu0 %v74
    %356 = vmatprep.subr.mxu0 0.0
    %357 = vmatpush1.msra.mxu0 %v73
    %358 = vmatprep.subr.mxu0 0.0
    %359 = vmatpush2.msra.mxu0 0.0
    %360 = vmatprep.subr.mxu0 0.0
    %361 = vmatpush2.msra.mxu0 0.0
    %362 = vmatprep.subr.mxu0 0.0
    %363 = vmatpush2.msra.mxu0 0.0
    %364 = vmatprep.subr.mxu0 0.0
    %365 = vmatpush2.msra.mxu0 0.0
    %366 = vmatprep.subr.mxu0 0.0
    %367 = vmatpush2.msra.mxu0 0.0
    %368 = vmatprep.subr.mxu0 0.0
    %369 = vmatpush2.msra.mxu0 0.0
    %370 = vmatprep.subr.mxu0 0.0
    %371 = vmatpush2.msra.mxu0 0.0
    %372 = vmatprep.subr.mxu0 0.0
    %373 = vmatpush2.msra.mxu0 0.0
    %374 = vmatprep.subr.mxu0 0.0
    %375 = vmatpush2.msra.mxu0 0.0
    %376 = vmatprep.subr.mxu0 0.0
    %377 = vmatpush2.msra.mxu0 0.0
    %378 = vmatprep.subr.mxu0 0.0
    %379 = vmatpush2.msra.mxu0 0.0
    %380 = vmatprep.subr.mxu0 0.0
    %381 = vmatpush2.msra.mxu0 0.0
    %382 = vmatprep.subr.mxu0 0.0
    %383 = vmatpush2.msra.mxu0 0.0
    %384 = vmatprep.subr.mxu0 0.0
    %385 = vmatpush2.msra.mxu0 0.0
    %386 = vmatprep.subr.mxu0 0.0
    %387 = vmatpush2.msra.mxu0 0.0
    %388 = vmatprep.subr.mxu0 0.0
    %389 = vmatpush2.msra.mxu0 0.0
    %390 = vmatprep.mubr.f32.mxu0 0.0
    %391 = vmatmul.mubr.f32.gmra.mxu0 %v96
    %v392 = vpop.f32.mrf.mxu0
    %v393 = vadd.f32 0.0, %v392
    %v394 = vpop.f32.mrf.mxu0
    %395 = vmatprep.mubr.f32.mxu0 0.0
    %396 = vmatmul.mubr.f32.gmra.mxu0 %v99
    %v397 = vpop.f32.mrf.mxu0
    %v398 = vadd.f32 0.0, %v397
    %v399 = vpop.f32.mrf.mxu0
    %400 = vdwg.mxu0
    %401 = vmatprep.subr.mxu0 0.0
    %402 = vmatpush1.msra.mxu0 0.0
    %403 = vmatprep.subr.mxu0 0.0
    %404 = vmatpush1.msra.mxu0 0.0
    %405 = vmatprep.subr.mxu0 0.0
    %406 = vmatpush1.msra.mxu0 0.0
    %407 = vmatprep.subr.mxu0 0.0
    %408 = vmatpush1.msra.mxu0 0.0
    %409 = vmatprep.subr.mxu0 0.0
    %410 = vmatpush1.msra.mxu0 0.0
    %411 = vmatprep.subr.mxu0 0.0
    %412 = vmatpush1.msra.mxu0 0.0
    %413 = vmatprep.subr.mxu0 0.0
    %414 = vmatpush1.msra.mxu0 0.0
    %415 = vmatprep.subr.mxu0 0.0
    %416 = vmatpush1.msra.mxu0 0.0
    %417 = vmatprep.subr.mxu0 0.0
    %418 = vmatpush1.msra.mxu0 0.0
    %419 = vmatprep.subr.mxu0 0.0
    %420 = vmatpush1.msra.mxu0 0.0
    %421 = vmatprep.subr.mxu0 0.0
    %422 = vmatpush1.msra.mxu0 0.0
    %423 = vmatprep.subr.mxu0 0.0
    %424 = vmatpush1.msra.mxu0 0.0
    %425 = vmatprep.subr.mxu0 0.0
    %426 = vmatpush1.msra.mxu0 %v81
    %427 = vmatprep.subr.mxu0 0.0
    %428 = vmatpush1.msra.mxu0 %v80
    %429 = vmatprep.subr.mxu0 0.0
    %430 = vmatpush1.msra.mxu0 %v79
    %431 = vmatprep.subr.mxu0 0.0
    %432 = vmatpush1.msra.mxu0 %v78
    %433 = vmatprep.subr.mxu0 0.0
    %434 = vmatpush2.msra.mxu0 0.0
    %435 = vmatprep.subr.mxu0 0.0
    %436 = vmatpush2.msra.mxu0 0.0
    %437 = vmatprep.subr.mxu0 0.0
    %438 = vmatpush2.msra.mxu0 0.0
    %439 = vmatprep.subr.mxu0 0.0
    %440 = vmatpush2.msra.mxu0 0.0
    %441 = vmatprep.subr.mxu0 0.0
    %442 = vmatpush2.msra.mxu0 0.0
    %443 = vmatprep.subr.mxu0 0.0
    %444 = vmatpush2.msra.mxu0 0.0
    %445 = vmatprep.subr.mxu0 0.0
    %446 = vmatpush2.msra.mxu0 0.0
    %447 = vmatprep.subr.mxu0 0.0
    %448 = vmatpush2.msra.mxu0 0.0
    %449 = vmatprep.subr.mxu0 0.0
    %450 = vmatpush2.msra.mxu0 0.0
    %451 = vmatprep.subr.mxu0 0.0
    %452 = vmatpush2.msra.mxu0 0.0
    %453 = vmatprep.subr.mxu0 0.0
    %454 = vmatpush2.msra.mxu0 0.0
    %455 = vmatprep.subr.mxu0 0.0
    %456 = vmatpush2.msra.mxu0 0.0
    %457 = vmatprep.subr.mxu0 0.0
    %458 = vmatpush2.msra.mxu0 0.0
    %459 = vmatprep.subr.mxu0 0.0
    %460 = vmatpush2.msra.mxu0 0.0
    %461 = vmatprep.subr.mxu0 0.0
    %462 = vmatpush2.msra.mxu0 0.0
    %463 = vmatprep.subr.mxu0 0.0
    %464 = vmatpush2.msra.mxu0 0.0
    %465 = vmatprep.mubr.f32.mxu0 0.0
    %466 = vmatmul.mubr.f32.gmra.mxu0 %v96
    %v467 = vpop.f32.mrf.mxu0
    %v468 = vadd.f32 0.0, %v467
    %v469 = vpop.f32.mrf.mxu0
    %470 = vmatprep.mubr.f32.mxu0 0.0
    %471 = vmatmul.mubr.f32.gmra.mxu0 %v99
    %v472 = vpop.f32.mrf.mxu0
    %v473 = vadd.f32 0.0, %v472
    %v474 = vpop.f32.mrf.mxu0
    %475 = vdwg.mxu0
    %476 = vmatprep.subr.mxu0 0.0
    %477 = vmatpush1.msra.mxu0 0.0
    %478 = vmatprep.subr.mxu0 0.0
    %479 = vmatpush1.msra.mxu0 0.0
    %480 = vmatprep.subr.mxu0 0.0
    %481 = vmatpush1.msra.mxu0 0.0
    %482 = vmatprep.subr.mxu0 0.0
    %483 = vmatpush1.msra.mxu0 0.0
    %484 = vmatprep.subr.mxu0 0.0
    %485 = vmatpush1.msra.mxu0 0.0
    %486 = vmatprep.subr.mxu0 0.0
    %487 = vmatpush1.msra.mxu0 0.0
    %488 = vmatprep.subr.mxu0 0.0
    %489 = vmatpush1.msra.mxu0 0.0
    %490 = vmatprep.subr.mxu0 0.0
    %491 = vmatpush1.msra.mxu0 0.0
    %492 = vmatprep.subr.mxu0 0.0
    %493 = vmatpush1.msra.mxu0 0.0
    %494 = vmatprep.subr.mxu0 0.0
    %495 = vmatpush1.msra.mxu0 0.0
    %496 = vmatprep.subr.mxu0 0.0
    %497 = vmatpush1.msra.mxu0 0.0
    %498 = vmatprep.subr.mxu0 0.0
    %499 = vmatpush1.msra.mxu0 0.0
    %500 = vmatprep.subr.mxu0 0.0
    %501 = vmatpush1.msra.mxu0 %v85
    %502 = vmatprep.subr.mxu0 0.0
    %503 = vmatpush1.msra.mxu0 %v84
    %504 = vmatprep.subr.mxu0 0.0
    %505 = vmatpush1.msra.mxu0 %v83
    %506 = vmatprep.subr.mxu0 0.0
    %507 = vmatpush1.msra.mxu0 %v82
    %508 = vmatprep.subr.mxu0 0.0
    %509 = vmatpush2.msra.mxu0 0.0
    %510 = vmatprep.subr.mxu0 0.0
    %511 = vmatpush2.msra.mxu0 0.0
    %512 = vmatprep.subr.mxu0 0.0
    %513 = vmatpush2.msra.mxu0 0.0
    %514 = vmatprep.subr.mxu0 0.0
    %515 = vmatpush2.msra.mxu0 0.0
    %516 = vmatprep.subr.mxu0 0.0
    %517 = vmatpush2.msra.mxu0 0.0
    %518 = vmatprep.subr.mxu0 0.0
    %519 = vmatpush2.msra.mxu0 0.0
    %520 = vmatprep.subr.mxu0 0.0
    %521 = vmatpush2.msra.mxu0 0.0
    %522 = vmatprep.subr.mxu0 0.0
    %523 = vmatpush2.msra.mxu0 0.0
    %524 = vmatprep.subr.mxu0 0.0
    %525 = vmatpush2.msra.mxu0 0.0
    %526 = vmatprep.subr.mxu0 0.0
    %527 = vmatpush2.msra.mxu0 0.0
    %528 = vmatprep.subr.mxu0 0.0
    %529 = vmatpush2.msra.mxu0 0.0
    %530 = vmatprep.subr.mxu0 0.0
    %531 = vmatpush2.msra.mxu0 0.0
    %532 = vmatprep.subr.mxu0 0.0
    %533 = vmatpush2.msra.mxu0 0.0
    %534 = vmatprep.subr.mxu0 0.0
    %535 = vmatpush2.msra.mxu0 0.0
    %536 = vmatprep.subr.mxu0 0.0
    %537 = vmatpush2.msra.mxu0 0.0
    %538 = vmatprep.subr.mxu0 0.0
    %539 = vmatpush2.msra.mxu0 0.0
    %540 = vmatprep.mubr.f32.mxu0 0.0
    %541 = vmatmul.mubr.f32.gmra.mxu0 %v96
    %v542 = vpop.f32.mrf.mxu0
    %v543 = vadd.f32 0.0, %v542
    %v544 = vpop.f32.mrf.mxu0
    %545 = vmatprep.mubr.f32.mxu0 0.0
    %546 = vmatmul.mubr.f32.gmra.mxu0 %v99
    %v547 = vpop.f32.mrf.mxu0
    %v548 = vadd.f32 0.0, %v547
    %v549 = vpop.f32.mrf.mxu0
    %550 = vdwg.mxu0
    %551 = vmatprep.subr.mxu0 0.0
    %552 = vmatpush1.msra.mxu0 0.0
    %553 = vmatprep.subr.mxu0 0.0
    %554 = vmatpush1.msra.mxu0 0.0
    %555 = vmatprep.subr.mxu0 0.0
    %556 = vmatpush1.msra.mxu0 0.0
    %557 = vmatprep.subr.mxu0 0.0
    %558 = vmatpush1.msra.mxu0 0.0
    %559 = vmatprep.subr.mxu0 0.0
    %560 = vmatpush1.msra.mxu0 0.0
    %561 = vmatprep.subr.mxu0 0.0
    %562 = vmatpush1.msra.mxu0 0.0
    %563 = vmatprep.subr.mxu0 0.0
    %564 = vmatpush1.msra.mxu0 0.0
    %565 = vmatprep.subr.mxu0 0.0
    %566 = vmatpush1.msra.mxu0 0.0
    %567 = vmatprep.subr.mxu0 0.0
    %568 = vmatpush1.msra.mxu0 0.0
    %569 = vmatprep.subr.mxu0 0.0
    %570 = vmatpush1.msra.mxu0 0.0
    %571 = vmatprep.subr.mxu0 0.0
    %572 = vmatpush1.msra.mxu0 0.0
    %573 = vmatprep.subr.mxu0 0.0
    %574 = vmatpush1.msra.mxu0 0.0
    %575 = vmatprep.subr.mxu0 0.0
    %576 = vmatpush1.msra.mxu0 %v90
    %577 = vmatprep.subr.mxu0 0.0
    %578 = vmatpush1.msra.mxu0 %v89
    %579 = vmatprep.subr.mxu0 0.0
    %580 = vmatpush1.msra.mxu0 %v88
    %581 = vmatprep.subr.mxu0 0.0
    %582 = vmatpush1.msra.mxu0 %v87
    %583 = vmatprep.subr.mxu0 0.0
    %584 = vmatpush2.msra.mxu0 0.0
    %585 = vmatprep.subr.mxu0 0.0
    %586 = vmatpush2.msra.mxu0 0.0
    %587 = vmatprep.subr.mxu0 0.0
    %588 = vmatpush2.msra.mxu0 0.0
    %589 = vmatprep.subr.mxu0 0.0
    %590 = vmatpush2.msra.mxu0 0.0
    %591 = vmatprep.subr.mxu0 0.0
    %592 = vmatpush2.msra.mxu0 0.0
    %593 = vmatprep.subr.mxu0 0.0
    %594 = vmatpush2.msra.mxu0 0.0
    %595 = vmatprep.subr.mxu0 0.0
    %596 = vmatpush2.msra.mxu0 0.0
    %597 = vmatprep.subr.mxu0 0.0
    %598 = vmatpush2.msra.mxu0 0.0
    %599 = vmatprep.subr.mxu0 0.0
    %600 = vmatpush2.msra.mxu0 0.0
    %601 = vmatprep.subr.mxu0 0.0
    %602 = vmatpush2.msra.mxu0 0.0
    %603 = vmatprep.subr.mxu0 0.0
    %604 = vmatpush2.msra.mxu0 0.0
    %605 = vmatprep.subr.mxu0 0.0
    %606 = vmatpush2.msra.mxu0 0.0
    %607 = vmatprep.subr.mxu0 0.0
    %608 = vmatpush2.msra.mxu0 0.0
    %609 = vmatprep.subr.mxu0 0.0
    %610 = vmatpush2.msra.mxu0 0.0
    %611 = vmatprep.subr.mxu0 0.0
    %612 = vmatpush2.msra.mxu0 0.0
    %613 = vmatprep.subr.mxu0 0.0
    %614 = vmatpush2.msra.mxu0 0.0
    %615 = vmatprep.mubr.f32.mxu0 0.0
    %616 = vmatmul.mubr.f32.gmra.mxu0 %v96
    %v617 = vpop.f32.mrf.mxu0
    %v618 = vadd.f32 0.0, %v617
    %v619 = vpop.f32.mrf.mxu0
    %620 = vmatprep.mubr.f32.mxu0 0.0
    %621 = vmatmul.mubr.f32.gmra.mxu0 %v99
    %v622 = vpop.f32.mrf.mxu0
    %v623 = vadd.f32 0.0, %v622
    %v624 = vpop.f32.mrf.mxu0
    %625 = vdwg.mxu0
    %626 = vmatprep.subr.mxu0 0.0
    %627 = vmatpush1.msra.mxu0 0.0
    %628 = vmatprep.subr.mxu0 0.0
    %629 = vmatpush1.msra.mxu0 0.0
    %630 = vmatprep.subr.mxu0 0.0
    %631 = vmatpush1.msra.mxu0 0.0
    %632 = vmatprep.subr.mxu0 0.0
    %633 = vmatpush1.msra.mxu0 0.0
    %634 = vmatprep.subr.mxu0 0.0
    %635 = vmatpush1.msra.mxu0 0.0
    %636 = vmatprep.subr.mxu0 0.0
    %637 = vmatpush1.msra.mxu0 0.0
    %638 = vmatprep.subr.mxu0 0.0
    %639 = vmatpush1.msra.mxu0 0.0
    %640 = vmatprep.subr.mxu0 0.0
    %641 = vmatpush1.msra.mxu0 0.0
    %642 = vmatprep.subr.mxu0 0.0
    %643 = vmatpush1.msra.mxu0 0.0
    %644 = vmatprep.subr.mxu0 0.0
    %645 = vmatpush1.msra.mxu0 0.0
    %646 = vmatprep.subr.mxu0 0.0
    %647 = vmatpush1.msra.mxu0 0.0
    %648 = vmatprep.subr.mxu0 0.0
    %649 = vmatpush1.msra.mxu0 0.0
    %650 = vmatprep.subr.mxu0 0.0
    %651 = vmatpush1.msra.mxu0 %v94
    %652 = vmatprep.subr.mxu0 0.0
    %653 = vmatpush1.msra.mxu0 %v93
    %654 = vmatprep.subr.mxu0 0.0
    %655 = vmatpush1.msra.mxu0 %v92
    %656 = vmatprep.subr.mxu0 0.0
    %657 = vmatpush1.msra.mxu0 %v91
    %658 = vmatprep.subr.mxu0 0.0
    %659 = vmatpush2.msra.mxu0 0.0
    %660 = vmatprep.subr.mxu0 0.0
    %661 = vmatpush2.msra.mxu0 0.0
    %662 = vmatprep.subr.mxu0 0.0
    %663 = vmatpush2.msra.mxu0 0.0
    %664 = vmatprep.subr.mxu0 0.0
    %665 = vmatpush2.msra.mxu0 0.0
    %666 = vmatprep.subr.mxu0 0.0
    %667 = vmatpush2.msra.mxu0 0.0
    %668 = vmatprep.subr.mxu0 0.0
    %669 = vmatpush2.msra.mxu0 0.0
    %670 = vmatprep.subr.mxu0 0.0
    %671 = vmatpush2.msra.mxu0 0.0
    %672 = vmatprep.subr.mxu0 0.0
    %673 = vmatpush2.msra.mxu0 0.0
    %674 = vmatprep.subr.mxu0 0.0
    %675 = vmatpush2.msra.mxu0 0.0
    %676 = vmatprep.subr.mxu0 0.0
    %677 = vmatpush2.msra.mxu0 0.0
    %678 = vmatprep.subr.mxu0 0.0
    %679 = vmatpush2.msra.mxu0 0.0
    %680 = vmatprep.subr.mxu0 0.0
    %681 = vmatpush2.msra.mxu0 0.0
    %682 = vmatprep.subr.mxu0 0.0
    %683 = vmatpush2.msra.mxu0 0.0
    %684 = vmatprep.subr.mxu0 0.0
    %685 = vmatpush2.msra.mxu0 0.0
    %686 = vmatprep.subr.mxu0 0.0
    %687 = vmatpush2.msra.mxu0 0.0
    %688 = vmatprep.subr.mxu0 0.0
    %689 = vmatpush2.msra.mxu0 0.0
    %690 = vmatprep.mubr.f32.mxu0 0.0
    %691 = vmatmul.mubr.f32.gmra.mxu0 %v96
    %v692 = vpop.f32.mrf.mxu0
    %v693 = vadd.f32 0.0, %v692
    %v694 = vpop.f32.mrf.mxu0
    %695 = vmatprep.mubr.f32.mxu0 0.0
    %696 = vmatmul.mubr.f32.gmra.mxu0 %v99
    %v697 = vpop.f32.mrf.mxu0
    %v698 = vadd.f32 0.0, %v697
    %v699 = vpop.f32.mrf.mxu0
    %700 = vdwg.mxu0
    %v701 = vld [vmem:[%s6] sm:$0xff]
    %v702 = vld [vmem:[%s6 + $0x8] sm:$0xff]
    %s703 = scalar_lea.vmem %s6, 16
    %v704 = vld [vmem:[%s703] sm:$0xff]
    %v705 = vld [vmem:[%s703 + $0x8] sm:$0xff]
    %v706 = vld [vmem:[%s7] sm:$0xff]
    %v707 = vld [vmem:[%s7 + $0x8] sm:$0xff]
    %v708 = vld [vmem:[%s7 + $0x10] sm:$0xff]
    %v709 = vld [vmem:[%s7 + $0x18] sm:$0xff]
    %vm710 = vcmask 64512
    %v712 = vsel %vm710, %v168, 0
    %v715 = vsel %vm710, %v173, 0
    %717 = vmatprep.subr.mxu0 0.0
    %718 = vmatpush1.msra.mxu0 0.0
    %719 = vmatprep.subr.mxu0 0.0
    %720 = vmatpush1.msra.mxu0 0.0
    %721 = vmatprep.subr.mxu0 0.0
    %722 = vmatpush1.msra.mxu0 0.0
    %723 = vmatprep.subr.mxu0 0.0
    %724 = vmatpush1.msra.mxu0 0.0
    %725 = vmatprep.subr.mxu0 0.0
    %726 = vmatpush1.msra.mxu0 0.0
    %727 = vmatprep.subr.mxu0 0.0
    %728 = vmatpush1.msra.mxu0 0.0
    %729 = vmatprep.subr.mxu0 0.0
    %730 = vmatpush1.msra.mxu0 0.0
    %731 = vmatprep.subr.mxu0 0.0
    %732 = vmatpush1.msra.mxu0 0.0
    %733 = vmatprep.subr.mxu0 0.0
    %734 = vmatpush1.msra.mxu0 0.0
    %735 = vmatprep.subr.mxu0 0.0
    %736 = vmatpush1.msra.mxu0 0.0
    %737 = vmatprep.subr.mxu0 0.0
    %738 = vmatpush1.msra.mxu0 0.0
    %739 = vmatprep.subr.mxu0 0.0
    %740 = vmatpush1.msra.mxu0 0.0
    %741 = vmatprep.subr.mxu0 0.0
    %742 = vmatpush1.msra.mxu0 0.0
    %743 = vmatprep.subr.mxu0 0.0
    %744 = vmatpush1.msra.mxu0 0.0
    %745 = vmatprep.subr.mxu0 0.0
    %746 = vmatpush1.msra.mxu0 0.0
    %747 = vmatprep.subr.mxu0 0.0
    %748 = vmatpush1.msra.mxu0 %v706
    %749 = vmatprep.subr.mxu0 0.0
    %750 = vmatpush2.msra.mxu0 0.0
    %751 = vmatprep.subr.mxu0 0.0
    %752 = vmatpush2.msra.mxu0 0.0
    %753 = vmatprep.subr.mxu0 0.0
    %754 = vmatpush2.msra.mxu0 0.0
    %755 = vmatprep.subr.mxu0 0.0
    %756 = vmatpush2.msra.mxu0 0.0
    %757 = vmatprep.subr.mxu0 0.0
    %758 = vmatpush2.msra.mxu0 0.0
    %759 = vmatprep.subr.mxu0 0.0
    %760 = vmatpush2.msra.mxu0 0.0
    %761 = vmatprep.subr.mxu0 0.0
    %762 = vmatpush2.msra.mxu0 0.0
    %763 = vmatprep.subr.mxu0 0.0
    %764 = vmatpush2.msra.mxu0 0.0
    %765 = vmatprep.subr.mxu0 0.0
    %766 = vmatpush2.msra.mxu0 0.0
    %767 = vmatprep.subr.mxu0 0.0
    %768 = vmatpush2.msra.mxu0 0.0
    %769 = vmatprep.subr.mxu0 0.0
    %770 = vmatpush2.msra.mxu0 0.0
    %771 = vmatprep.subr.mxu0 0.0
    %772 = vmatpush2.msra.mxu0 0.0
    %773 = vmatprep.subr.mxu0 0.0
    %774 = vmatpush2.msra.mxu0 0.0
    %775 = vmatprep.subr.mxu0 0.0
    %776 = vmatpush2.msra.mxu0 0.0
    %777 = vmatprep.subr.mxu0 0.0
    %778 = vmatpush2.msra.mxu0 0.0
    %779 = vmatprep.subr.mxu0 0.0
    %780 = vmatpush2.msra.mxu0 0.0
    %781 = vmatprep.mubr.f32.mxu0 0.0
    %782 = vmatmul.mubr.f32.gmra.mxu0 %v712
    %v783 = vpop.f32.mrf.mxu0
    %v784 = vadd.f32 0.0, %v783
    %v785 = vpop.f32.mrf.mxu0
    %786 = vmatprep.mubr.f32.mxu0 0.0
    %787 = vmatmul.mubr.f32.gmra.mxu0 %v715
    %v788 = vpop.f32.mrf.mxu0
    %v789 = vadd.f32 0.0, %v788
    %v790 = vpop.f32.mrf.mxu0
    %791 = vdwg.mxu0
    %v793 = vsel %vm710, %v243, 0
    %v796 = vsel %vm710, %v248, 0
    %798 = vmatprep.subr.mxu0 0.0
    %799 = vmatpush1.msra.mxu0 0.0
    %800 = vmatprep.subr.mxu0 0.0
    %801 = vmatpush1.msra.mxu0 0.0
    %802 = vmatprep.subr.mxu0 0.0
    %803 = vmatpush1.msra.mxu0 0.0
    %804 = vmatprep.subr.mxu0 0.0
    %805 = vmatpush1.msra.mxu0 0.0
    %806 = vmatprep.subr.mxu0 0.0
    %807 = vmatpush1.msra.mxu0 0.0
    %808 = vmatprep.subr.mxu0 0.0
    %809 = vmatpush1.msra.mxu0 0.0
    %810 = vmatprep.subr.mxu0 0.0
    %811 = vmatpush1.msra.mxu0 0.0
    %812 = vmatprep.subr.mxu0 0.0
    %813 = vmatpush1.msra.mxu0 0.0
    %814 = vmatprep.subr.mxu0 0.0
    %815 = vmatpush1.msra.mxu0 0.0
    %816 = vmatprep.subr.mxu0 0.0
    %817 = vmatpush1.msra.mxu0 0.0
    %818 = vmatprep.subr.mxu0 0.0
    %819 = vmatpush1.msra.mxu0 0.0
    %820 = vmatprep.subr.mxu0 0.0
    %821 = vmatpush1.msra.mxu0 0.0
    %822 = vmatprep.subr.mxu0 0.0
    %823 = vmatpush1.msra.mxu0 0.0
    %824 = vmatprep.subr.mxu0 0.0
    %825 = vmatpush1.msra.mxu0 0.0
    %826 = vmatprep.subr.mxu0 0.0
    %827 = vmatpush1.msra.mxu0 0.0
    %828 = vmatprep.subr.mxu0 0.0
    %829 = vmatpush1.msra.mxu0 %v707
    %830 = vmatprep.subr.mxu0 0.0
    %831 = vmatpush2.msra.mxu0 0.0
    %832 = vmatprep.subr.mxu0 0.0
    %833 = vmatpush2.msra.mxu0 0.0
    %834 = vmatprep.subr.mxu0 0.0
    %835 = vmatpush2.msra.mxu0 0.0
    %836 = vmatprep.subr.mxu0 0.0
    %837 = vmatpush2.msra.mxu0 0.0
    %838 = vmatprep.subr.mxu0 0.0
    %839 = vmatpush2.msra.mxu0 0.0
    %840 = vmatprep.subr.mxu0 0.0
    %841 = vmatpush2.msra.mxu0 0.0
    %842 = vmatprep.subr.mxu0 0.0
    %843 = vmatpush2.msra.mxu0 0.0
    %844 = vmatprep.subr.mxu0 0.0
    %845 = vmatpush2.msra.mxu0 0.0
    %846 = vmatprep.subr.mxu0 0.0
    %847 = vmatpush2.msra.mxu0 0.0
    %848 = vmatprep.subr.mxu0 0.0
    %849 = vmatpush2.msra.mxu0 0.0
    %850 = vmatprep.subr.mxu0 0.0
    %851 = vmatpush2.msra.mxu0 0.0
    %852 = vmatprep.subr.mxu0 0.0
    %853 = vmatpush2.msra.mxu0 0.0
    %854 = vmatprep.subr.mxu0 0.0
    %855 = vmatpush2.msra.mxu0 0.0
    %856 = vmatprep.subr.mxu0 0.0
    %857 = vmatpush2.msra.mxu0 0.0
    %858 = vmatprep.subr.mxu0 0.0
    %859 = vmatpush2.msra.mxu0 0.0
    %860 = vmatprep.subr.mxu0 0.0
    %861 = vmatpush2.msra.mxu0 0.0
    %862 = vmatprep.mubr.f32.mxu0 0.0
    %863 = vmatmul.mubr.f32.gmra.mxu0 %v793
    %v864 = vpop.f32.mrf.mxu0
    %v865 = vadd.f32 0.0, %v864
    %v866 = vpop.f32.mrf.mxu0
    %867 = vmatprep.mubr.f32.mxu0 0.0
    %868 = vmatmul.mubr.f32.gmra.mxu0 %v796
    %v869 = vpop.f32.mrf.mxu0
    %v870 = vadd.f32 0.0, %v869
    %v871 = vpop.f32.mrf.mxu0
    %872 = vdwg.mxu0
    %v874 = vsel %vm710, %v318, 0
    %v877 = vsel %vm710, %v323, 0
    %879 = vmatprep.subr.mxu0 0.0
    %880 = vmatpush1.msra.mxu0 0.0
    %881 = vmatprep.subr.mxu0 0.0
    %882 = vmatpush1.msra.mxu0 0.0
    %883 = vmatprep.subr.mxu0 0.0
    %884 = vmatpush1.msra.mxu0 0.0
    %885 = vmatprep.subr.mxu0 0.0
    %886 = vmatpush1.msra.mxu0 0.0
    %887 = vmatprep.subr.mxu0 0.0
    %888 = vmatpush1.msra.mxu0 0.0
    %889 = vmatprep.subr.mxu0 0.0
    %890 = vmatpush1.msra.mxu0 0.0
    %891 = vmatprep.subr.mxu0 0.0
    %892 = vmatpush1.msra.mxu0 0.0
    %893 = vmatprep.subr.mxu0 0.0
    %894 = vmatpush1.msra.mxu0 0.0
    %895 = vmatprep.subr.mxu0 0.0
    %896 = vmatpush1.msra.mxu0 0.0
    %897 = vmatprep.subr.mxu0 0.0
    %898 = vmatpush1.msra.mxu0 0.0
    %899 = vmatprep.subr.mxu0 0.0
    %900 = vmatpush1.msra.mxu0 0.0
    %901 = vmatprep.subr.mxu0 0.0
    %902 = vmatpush1.msra.mxu0 0.0
    %903 = vmatprep.subr.mxu0 0.0
    %904 = vmatpush1.msra.mxu0 0.0
    %905 = vmatprep.subr.mxu0 0.0
    %906 = vmatpush1.msra.mxu0 0.0
    %907 = vmatprep.subr.mxu0 0.0
    %908 = vmatpush1.msra.mxu0 0.0
    %909 = vmatprep.subr.mxu0 0.0
    %910 = vmatpush1.msra.mxu0 %v708
    %911 = vmatprep.subr.mxu0 0.0
    %912 = vmatpush2.msra.mxu0 0.0
    %913 = vmatprep.subr.mxu0 0.0
    %914 = vmatpush2.msra.mxu0 0.0
    %915 = vmatprep.subr.mxu0 0.0
    %916 = vmatpush2.msra.mxu0 0.0
    %917 = vmatprep.subr.mxu0 0.0
    %918 = vmatpush2.msra.mxu0 0.0
    %919 = vmatprep.subr.mxu0 0.0
    %920 = vmatpush2.msra.mxu0 0.0
    %921 = vmatprep.subr.mxu0 0.0
    %922 = vmatpush2.msra.mxu0 0.0
    %923 = vmatprep.subr.mxu0 0.0
    %924 = vmatpush2.msra.mxu0 0.0
    %925 = vmatprep.subr.mxu0 0.0
    %926 = vmatpush2.msra.mxu0 0.0
    %927 = vmatprep.subr.mxu0 0.0
    %928 = vmatpush2.msra.mxu0 0.0
    %929 = vmatprep.subr.mxu0 0.0
    %930 = vmatpush2.msra.mxu0 0.0
    %931 = vmatprep.subr.mxu0 0.0
    %932 = vmatpush2.msra.mxu0 0.0
    %933 = vmatprep.subr.mxu0 0.0
    %934 = vmatpush2.msra.mxu0 0.0
    %935 = vmatprep.subr.mxu0 0.0
    %936 = vmatpush2.msra.mxu0 0.0
    %937 = vmatprep.subr.mxu0 0.0
    %938 = vmatpush2.msra.mxu0 0.0
    %939 = vmatprep.subr.mxu0 0.0
    %940 = vmatpush2.msra.mxu0 0.0
    %941 = vmatprep.subr.mxu0 0.0
    %942 = vmatpush2.msra.mxu0 0.0
    %943 = vmatprep.mubr.f32.mxu0 0.0
    %944 = vmatmul.mubr.f32.gmra.mxu0 %v874
    %v945 = vpop.f32.mrf.mxu0
    %v946 = vadd.f32 0.0, %v945
    %v947 = vpop.f32.mrf.mxu0
    %948 = vmatprep.mubr.f32.mxu0 0.0
    %949 = vmatmul.mubr.f32.gmra.mxu0 %v877
    %v950 = vpop.f32.mrf.mxu0
    %v951 = vadd.f32 0.0, %v950
    %v952 = vpop.f32.mrf.mxu0
    %953 = vdwg.mxu0
    %v955 = vsel %vm710, %v393, 0
    %v958 = vsel %vm710, %v398, 0
    %960 = vmatprep.subr.mxu0 0.0
    %961 = vmatpush1.msra.mxu0 0.0
    %962 = vmatprep.subr.mxu0 0.0
    %963 = vmatpush1.msra.mxu0 0.0
    %964 = vmatprep.subr.mxu0 0.0
    %965 = vmatpush1.msra.mxu0 0.0
    %966 = vmatprep.subr.mxu0 0.0
    %967 = vmatpush1.msra.mxu0 0.0
    %968 = vmatprep.subr.mxu0 0.0
    %969 = vmatpush1.msra.mxu0 0.0
    %970 = vmatprep.subr.mxu0 0.0
    %971 = vmatpush1.msra.mxu0 0.0
    %972 = vmatprep.subr.mxu0 0.0
    %973 = vmatpush1.msra.mxu0 0.0
    %974 = vmatprep.subr.mxu0 0.0
    %975 = vmatpush1.msra.mxu0 0.0
    %976 = vmatprep.subr.mxu0 0.0
    %977 = vmatpush1.msra.mxu0 0.0
    %978 = vmatprep.subr.mxu0 0.0
    %979 = vmatpush1.msra.mxu0 0.0
    %980 = vmatprep.subr.mxu0 0.0
    %981 = vmatpush1.msra.mxu0 0.0
    %982 = vmatprep.subr.mxu0 0.0
    %983 = vmatpush1.msra.mxu0 0.0
    %984 = vmatprep.subr.mxu0 0.0
    %985 = vmatpush1.msra.mxu0 0.0
    %986 = vmatprep.subr.mxu0 0.0
    %987 = vmatpush1.msra.mxu0 0.0
    %988 = vmatprep.subr.mxu0 0.0
    %989 = vmatpush1.msra.mxu0 0.0
    %990 = vmatprep.subr.mxu0 0.0
    %991 = vmatpush1.msra.mxu0 %v709
    %992 = vmatprep.subr.mxu0 0.0
    %993 = vmatpush2.msra.mxu0 0.0
    %994 = vmatprep.subr.mxu0 0.0
    %995 = vmatpush2.msra.mxu0 0.0
    %996 = vmatprep.subr.mxu0 0.0
    %997 = vmatpush2.msra.mxu0 0.0
    %998 = vmatprep.subr.mxu0 0.0
    %999 = vmatpush2.msra.mxu0 0.0
    %1000 = vmatprep.subr.mxu0 0.0
    %1001 = vmatpush2.msra.mxu0 0.0
    %1002 = vmatprep.subr.mxu0 0.0
    %1003 = vmatpush2.msra.mxu0 0.0
    %1004 = vmatprep.subr.mxu0 0.0
    %1005 = vmatpush2.msra.mxu0 0.0
    %1006 = vmatprep.subr.mxu0 0.0
    %1007 = vmatpush2.msra.mxu0 0.0
    %1008 = vmatprep.subr.mxu0 0.0
    %1009 = vmatpush2.msra.mxu0 0.0
    %1010 = vmatprep.subr.mxu0 0.0
    %1011 = vmatpush2.msra.mxu0 0.0
    %1012 = vmatprep.subr.mxu0 0.0
    %1013 = vmatpush2.msra.mxu0 0.0
    %1014 = vmatprep.subr.mxu0 0.0
    %1015 = vmatpush2.msra.mxu0 0.0
    %1016 = vmatprep.subr.mxu0 0.0
    %1017 = vmatpush2.msra.mxu0 0.0
    %1018 = vmatprep.subr.mxu0 0.0
    %1019 = vmatpush2.msra.mxu0 0.0
    %1020 = vmatprep.subr.mxu0 0.0
    %1021 = vmatpush2.msra.mxu0 0.0
    %1022 = vmatprep.subr.mxu0 0.0
    %1023 = vmatpush2.msra.mxu0 0.0
    %1024 = vmatprep.mubr.f32.mxu0 0.0
    %1025 = vmatmul.mubr.f32.gmra.mxu0 %v955
    %v1026 = vpop.f32.mrf.mxu0
    %v1027 = vadd.f32 0.0, %v1026
    %v1028 = vpop.f32.mrf.mxu0
    %1029 = vmatprep.mubr.f32.mxu0 0.0
    %1030 = vmatmul.mubr.f32.gmra.mxu0 %v958
    %v1031 = vpop.f32.mrf.mxu0
    %v1032 = vadd.f32 0.0, %v1031
    %v1033 = vpop.f32.mrf.mxu0
    %1034 = vdwg.mxu0
    %v1035 = vmul.f32 %v168, %v701
    %v1036 = vmul.f32 %v173, %v702
    %v1037 = vmul.f32 %v243, %v701
    %v1038 = vmul.f32 %v248, %v702
    %v1039 = vmul.f32 %v318, %v701
    %v1040 = vmul.f32 %v323, %v702
    %v1041 = vmul.f32 %v393, %v701
    %v1042 = vmul.f32 %v398, %v702
    %v1043 = vmul.f32 %v784, %v704
    %v1044 = vmul.f32 %v789, %v705
    %v1045 = vmul.f32 %v865, %v704
    %v1046 = vmul.f32 %v870, %v705
    %v1047 = vmul.f32 %v946, %v704
    %v1048 = vmul.f32 %v951, %v705
    %v1049 = vmul.f32 %v1027, %v704
    %v1050 = vmul.f32 %v1032, %v705
    %v1051 = vadd.f32 %v1035, %v1043
    %v1052 = vadd.f32 %v1036, %v1044
    %v1053 = vadd.f32 %v1037, %v1045
    %v1054 = vadd.f32 %v1038, %v1046
    %v1055 = vadd.f32 %v1039, %v1047
    %v1056 = vadd.f32 %v1040, %v1048
    %v1057 = vadd.f32 %v1041, %v1049
    %v1058 = vadd.f32 %v1042, %v1050
    %v1060 = vsel %vm710, %v468, 0
    %v1063 = vsel %vm710, %v473, 0
    %1065 = vmatprep.subr.mxu0 0.0
    %1066 = vmatpush1.msra.mxu0 0.0
    %1067 = vmatprep.subr.mxu0 0.0
    %1068 = vmatpush1.msra.mxu0 0.0
    %1069 = vmatprep.subr.mxu0 0.0
    %1070 = vmatpush1.msra.mxu0 0.0
    %1071 = vmatprep.subr.mxu0 0.0
    %1072 = vmatpush1.msra.mxu0 0.0
    %1073 = vmatprep.subr.mxu0 0.0
    %1074 = vmatpush1.msra.mxu0 0.0
    %1075 = vmatprep.subr.mxu0 0.0
    %1076 = vmatpush1.msra.mxu0 0.0
    %1077 = vmatprep.subr.mxu0 0.0
    %1078 = vmatpush1.msra.mxu0 0.0
    %1079 = vmatprep.subr.mxu0 0.0
    %1080 = vmatpush1.msra.mxu0 0.0
    %1081 = vmatprep.subr.mxu0 0.0
    %1082 = vmatpush1.msra.mxu0 0.0
    %1083 = vmatprep.subr.mxu0 0.0
    %1084 = vmatpush1.msra.mxu0 0.0
    %1085 = vmatprep.subr.mxu0 0.0
    %1086 = vmatpush1.msra.mxu0 0.0
    %1087 = vmatprep.subr.mxu0 0.0
    %1088 = vmatpush1.msra.mxu0 0.0
    %1089 = vmatprep.subr.mxu0 0.0
    %1090 = vmatpush1.msra.mxu0 0.0
    %1091 = vmatprep.subr.mxu0 0.0
    %1092 = vmatpush1.msra.mxu0 0.0
    %1093 = vmatprep.subr.mxu0 0.0
    %1094 = vmatpush1.msra.mxu0 0.0
    %1095 = vmatprep.subr.mxu0 0.0
    %1096 = vmatpush1.msra.mxu0 %v706
    %1097 = vmatprep.subr.mxu0 0.0
    %1098 = vmatpush2.msra.mxu0 0.0
    %1099 = vmatprep.subr.mxu0 0.0
    %1100 = vmatpush2.msra.mxu0 0.0
    %1101 = vmatprep.subr.mxu0 0.0
    %1102 = vmatpush2.msra.mxu0 0.0
    %1103 = vmatprep.subr.mxu0 0.0
    %1104 = vmatpush2.msra.mxu0 0.0
    %1105 = vmatprep.subr.mxu0 0.0
    %1106 = vmatpush2.msra.mxu0 0.0
    %1107 = vmatprep.subr.mxu0 0.0
    %1108 = vmatpush2.msra.mxu0 0.0
    %1109 = vmatprep.subr.mxu0 0.0
    %1110 = vmatpush2.msra.mxu0 0.0
    %1111 = vmatprep.subr.mxu0 0.0
    %1112 = vmatpush2.msra.mxu0 0.0
    %1113 = vmatprep.subr.mxu0 0.0
    %1114 = vmatpush2.msra.mxu0 0.0
    %1115 = vmatprep.subr.mxu0 0.0
    %1116 = vmatpush2.msra.mxu0 0.0
    %1117 = vmatprep.subr.mxu0 0.0
    %1118 = vmatpush2.msra.mxu0 0.0
    %1119 = vmatprep.subr.mxu0 0.0
    %1120 = vmatpush2.msra.mxu0 0.0
    %1121 = vmatprep.subr.mxu0 0.0
    %1122 = vmatpush2.msra.mxu0 0.0
    %1123 = vmatprep.subr.mxu0 0.0
    %1124 = vmatpush2.msra.mxu0 0.0
    %1125 = vmatprep.subr.mxu0 0.0
    %1126 = vmatpush2.msra.mxu0 0.0
    %1127 = vmatprep.subr.mxu0 0.0
    %1128 = vmatpush2.msra.mxu0 0.0
    %1129 = vmatprep.mubr.f32.mxu0 0.0
    %1130 = vmatmul.mubr.f32.gmra.mxu0 %v1060
    %v1131 = vpop.f32.mrf.mxu0
    %v1132 = vadd.f32 0.0, %v1131
    %v1133 = vpop.f32.mrf.mxu0
    %1134 = vmatprep.mubr.f32.mxu0 0.0
    %1135 = vmatmul.mubr.f32.gmra.mxu0 %v1063
    %v1136 = vpop.f32.mrf.mxu0
    %v1137 = vadd.f32 0.0, %v1136
    %v1138 = vpop.f32.mrf.mxu0
    %1139 = vdwg.mxu0
    %v1141 = vsel %vm710, %v543, 0
    %v1144 = vsel %vm710, %v548, 0
    %1146 = vmatprep.subr.mxu0 0.0
    %1147 = vmatpush1.msra.mxu0 0.0
    %1148 = vmatprep.subr.mxu0 0.0
    %1149 = vmatpush1.msra.mxu0 0.0
    %1150 = vmatprep.subr.mxu0 0.0
    %1151 = vmatpush1.msra.mxu0 0.0
    %1152 = vmatprep.subr.mxu0 0.0
    %1153 = vmatpush1.msra.mxu0 0.0
    %1154 = vmatprep.subr.mxu0 0.0
    %1155 = vmatpush1.msra.mxu0 0.0
    %1156 = vmatprep.subr.mxu0 0.0
    %1157 = vmatpush1.msra.mxu0 0.0
    %1158 = vmatprep.subr.mxu0 0.0
    %1159 = vmatpush1.msra.mxu0 0.0
    %1160 = vmatprep.subr.mxu0 0.0
    %1161 = vmatpush1.msra.mxu0 0.0
    %1162 = vmatprep.subr.mxu0 0.0
    %1163 = vmatpush1.msra.mxu0 0.0
    %1164 = vmatprep.subr.mxu0 0.0
    %1165 = vmatpush1.msra.mxu0 0.0
    %1166 = vmatprep.subr.mxu0 0.0
    %1167 = vmatpush1.msra.mxu0 0.0
    %1168 = vmatprep.subr.mxu0 0.0
    %1169 = vmatpush1.msra.mxu0 0.0
    %1170 = vmatprep.subr.mxu0 0.0
    %1171 = vmatpush1.msra.mxu0 0.0
    %1172 = vmatprep.subr.mxu0 0.0
    %1173 = vmatpush1.msra.mxu0 0.0
    %1174 = vmatprep.subr.mxu0 0.0
    %1175 = vmatpush1.msra.mxu0 0.0
    %1176 = vmatprep.subr.mxu0 0.0
    %1177 = vmatpush1.msra.mxu0 %v707
    %1178 = vmatprep.subr.mxu0 0.0
    %1179 = vmatpush2.msra.mxu0 0.0
    %1180 = vmatprep.subr.mxu0 0.0
    %1181 = vmatpush2.msra.mxu0 0.0
    %1182 = vmatprep.subr.mxu0 0.0
    %1183 = vmatpush2.msra.mxu0 0.0
    %1184 = vmatprep.subr.mxu0 0.0
    %1185 = vmatpush2.msra.mxu0 0.0
    %1186 = vmatprep.subr.mxu0 0.0
    %1187 = vmatpush2.msra.mxu0 0.0
    %1188 = vmatprep.subr.mxu0 0.0
    %1189 = vmatpush2.msra.mxu0 0.0
    %1190 = vmatprep.subr.mxu0 0.0
    %1191 = vmatpush2.msra.mxu0 0.0
    %1192 = vmatprep.subr.mxu0 0.0
    %1193 = vmatpush2.msra.mxu0 0.0
    %1194 = vmatprep.subr.mxu0 0.0
    %1195 = vmatpush2.msra.mxu0 0.0
    %1196 = vmatprep.subr.mxu0 0.0
    %1197 = vmatpush2.msra.mxu0 0.0
    %1198 = vmatprep.subr.mxu0 0.0
    %1199 = vmatpush2.msra.mxu0 0.0
    %1200 = vmatprep.subr.mxu0 0.0
    %1201 = vmatpush2.msra.mxu0 0.0
    %1202 = vmatprep.subr.mxu0 0.0
    %1203 = vmatpush2.msra.mxu0 0.0
    %1204 = vmatprep.subr.mxu0 0.0
    %1205 = vmatpush2.msra.mxu0 0.0
    %1206 = vmatprep.subr.mxu0 0.0
    %1207 = vmatpush2.msra.mxu0 0.0
    %1208 = vmatprep.subr.mxu0 0.0
    %1209 = vmatpush2.msra.mxu0 0.0
    %1210 = vmatprep.mubr.f32.mxu0 0.0
    %1211 = vmatmul.mubr.f32.gmra.mxu0 %v1141
    %v1212 = vpop.f32.mrf.mxu0
    %v1213 = vadd.f32 0.0, %v1212
    %v1214 = vpop.f32.mrf.mxu0
    %1215 = vmatprep.mubr.f32.mxu0 0.0
    %1216 = vmatmul.mubr.f32.gmra.mxu0 %v1144
    %v1217 = vpop.f32.mrf.mxu0
    %v1218 = vadd.f32 0.0, %v1217
    %v1219 = vpop.f32.mrf.mxu0
    %1220 = vdwg.mxu0
    %v1221 = vmul.f32 %v468, %v701
    %v1222 = vmul.f32 %v473, %v702
    %v1223 = vmul.f32 %v543, %v701
    %v1224 = vmul.f32 %v548, %v702
    %v1225 = vmul.f32 %v1132, %v704
    %v1226 = vmul.f32 %v1137, %v705
    %v1227 = vmul.f32 %v1213, %v704
    %v1228 = vmul.f32 %v1218, %v705
    %v1229 = vadd.f32 %v1221, %v1225
    %v1230 = vadd.f32 %v1222, %v1226
    %v1231 = vadd.f32 %v1223, %v1227
    %v1232 = vadd.f32 %v1224, %v1228
    %v1234 = vsel %vm710, %v1051, 0
    %v1237 = vsel %vm710, %v1052, 0
    %v1240 = vsel %vm710, %v1053, 0
    %v1243 = vsel %vm710, %v1054, 0
    %v1246 = vsel %vm710, %v1229, 0
    %v1249 = vsel %vm710, %v1230, 0
    %1251 = vmatprep.subr.mxu0 0.0
    %1252 = vmatpush1.xpose.msra.mxu0 0.0
    %1253 = vmatprep.subr.mxu0 0.0
    %1254 = vmatpush1.xpose.msra.mxu0 0.0
    %1255 = vmatprep.subr.mxu0 0.0
    %1256 = vmatpush1.xpose.msra.mxu0 0.0
    %1257 = vmatprep.subr.mxu0 0.0
    %1258 = vmatpush1.xpose.msra.mxu0 0.0
    %1259 = vmatprep.subr.mxu0 0.0
    %1260 = vmatpush1.xpose.msra.mxu0 0.0
    %1261 = vmatprep.subr.mxu0 0.0
    %1262 = vmatpush1.xpose.msra.mxu0 0.0
    %1263 = vmatprep.subr.mxu0 0.0
    %1264 = vmatpush1.xpose.msra.mxu0 0.0
    %1265 = vmatprep.subr.mxu0 0.0
    %1266 = vmatpush1.xpose.msra.mxu0 0.0
    %1267 = vmatprep.subr.mxu0 0.0
    %1268 = vmatpush1.xpose.msra.mxu0 0.0
    %1269 = vmatprep.subr.mxu0 0.0
    %1270 = vmatpush1.xpose.msra.mxu0 0.0
    %1271 = vmatprep.subr.mxu0 0.0
    %1272 = vmatpush1.xpose.msra.mxu0 0.0
    %1273 = vmatprep.subr.mxu0 0.0
    %1274 = vmatpush1.xpose.msra.mxu0 0.0
    %1275 = vmatprep.subr.mxu0 0.0
    %1276 = vmatpush1.xpose.msra.mxu0 0.0
    %1277 = vmatprep.subr.mxu0 0.0
    %1278 = vmatpush1.xpose.msra.mxu0 0.0
    %1279 = vmatprep.subr.mxu0 0.0
    %1280 = vmatpush1.xpose.msra.mxu0 %v1249
    %1281 = vmatprep.subr.mxu0 0.0
    %1282 = vmatpush1.xpose.msra.mxu0 %v1246
    %1283 = vmatprep.subr.mxu0 0.0
    %1284 = vmatpush2.xpose.msra.mxu0 0.0
    %1285 = vmatprep.subr.mxu0 0.0
    %1286 = vmatpush2.xpose.msra.mxu0 0.0
    %1287 = vmatprep.subr.mxu0 0.0
    %1288 = vmatpush2.xpose.msra.mxu0 0.0
    %1289 = vmatprep.subr.mxu0 0.0
    %1290 = vmatpush2.xpose.msra.mxu0 0.0
    %1291 = vmatprep.subr.mxu0 0.0
    %1292 = vmatpush2.xpose.msra.mxu0 0.0
    %1293 = vmatprep.subr.mxu0 0.0
    %1294 = vmatpush2.xpose.msra.mxu0 0.0
    %1295 = vmatprep.subr.mxu0 0.0
    %1296 = vmatpush2.xpose.msra.mxu0 0.0
    %1297 = vmatprep.subr.mxu0 0.0
    %1298 = vmatpush2.xpose.msra.mxu0 0.0
    %1299 = vmatprep.subr.mxu0 0.0
    %1300 = vmatpush2.xpose.msra.mxu0 0.0
    %1301 = vmatprep.subr.mxu0 0.0
    %1302 = vmatpush2.xpose.msra.mxu0 0.0
    %1303 = vmatprep.subr.mxu0 0.0
    %1304 = vmatpush2.xpose.msra.mxu0 0.0
    %1305 = vmatprep.subr.mxu0 0.0
    %1306 = vmatpush2.xpose.msra.mxu0 0.0
    %1307 = vmatprep.subr.mxu0 0.0
    %1308 = vmatpush2.xpose.msra.mxu0 0.0
    %1309 = vmatprep.subr.mxu0 0.0
    %1310 = vmatpush2.xpose.msra.mxu0 0.0
    %1311 = vmatprep.subr.mxu0 0.0
    %1312 = vmatpush2.xpose.msra.mxu0 0.0
    %1313 = vmatprep.subr.mxu0 0.0
    %1314 = vmatpush2.xpose.msra.mxu0 0.0
    %1315 = vmatprep.mubr.f32.mxu0 0.0
    %1316 = vmatmul.mubr.f32.gmra.mxu0 %v1234
    %v1317 = vpop.f32.mrf.mxu0
    %v1318 = vadd.f32 0.0, %v1317
    %v1319 = vpop.f32.mrf.mxu0
    %1320 = vmatprep.mubr.f32.mxu0 0.0
    %1321 = vmatmul.mubr.f32.gmra.mxu0 %v1237
    %v1322 = vpop.f32.mrf.mxu0
    %v1323 = vadd.f32 0.0, %v1322
    %v1324 = vpop.f32.mrf.mxu0
    %1325 = vmatprep.mubr.f32.mxu0 0.0
    %1326 = vmatmul.mubr.f32.gmra.mxu0 %v1240
    %v1327 = vpop.f32.mrf.mxu0
    %v1328 = vadd.f32 0.0, %v1327
    %v1329 = vpop.f32.mrf.mxu0
    %1330 = vmatprep.mubr.f32.mxu0 0.0
    %1331 = vmatmul.mubr.f32.gmra.mxu0 %v1243
    %v1332 = vpop.f32.mrf.mxu0
    %v1333 = vadd.f32 0.0, %v1332
    %v1334 = vpop.f32.mrf.mxu0
    %1335 = vdwg.mxu0
    %v1337 = vsel %vm710, %v1055, 0
    %v1340 = vsel %vm710, %v1056, 0
    %v1343 = vsel %vm710, %v1057, 0
    %v1346 = vsel %vm710, %v1058, 0
    %v1349 = vsel %vm710, %v1231, 0
    %v1352 = vsel %vm710, %v1232, 0
    %1354 = vmatprep.subr.mxu0 0.0
    %1355 = vmatpush1.xpose.msra.mxu0 0.0
    %1356 = vmatprep.subr.mxu0 0.0
    %1357 = vmatpush1.xpose.msra.mxu0 0.0
    %1358 = vmatprep.subr.mxu0 0.0
    %1359 = vmatpush1.xpose.msra.mxu0 0.0
    %1360 = vmatprep.subr.mxu0 0.0
    %1361 = vmatpush1.xpose.msra.mxu0 0.0
    %1362 = vmatprep.subr.mxu0 0.0
    %1363 = vmatpush1.xpose.msra.mxu0 0.0
    %1364 = vmatprep.subr.mxu0 0.0
    %1365 = vmatpush1.xpose.msra.mxu0 0.0
    %1366 = vmatprep.subr.mxu0 0.0
    %1367 = vmatpush1.xpose.msra.mxu0 0.0
    %1368 = vmatprep.subr.mxu0 0.0
    %1369 = vmatpush1.xpose.msra.mxu0 0.0
    %1370 = vmatprep.subr.mxu0 0.0
    %1371 = vmatpush1.xpose.msra.mxu0 0.0
    %1372 = vmatprep.subr.mxu0 0.0
    %1373 = vmatpush1.xpose.msra.mxu0 0.0
    %1374 = vmatprep.subr.mxu0 0.0
    %1375 = vmatpush1.xpose.msra.mxu0 0.0
    %1376 = vmatprep.subr.mxu0 0.0
    %1377 = vmatpush1.xpose.msra.mxu0 0.0
    %1378 = vmatprep.subr.mxu0 0.0
    %1379 = vmatpush1.xpose.msra.mxu0 0.0
    %1380 = vmatprep.subr.mxu0 0.0
    %1381 = vmatpush1.xpose.msra.mxu0 0.0
    %1382 = vmatprep.subr.mxu0 0.0
    %1383 = vmatpush1.xpose.msra.mxu0 %v1352
    %1384 = vmatprep.subr.mxu0 0.0
    %1385 = vmatpush1.xpose.msra.mxu0 %v1349
    %1386 = vmatprep.subr.mxu0 0.0
    %1387 = vmatpush2.xpose.msra.mxu0 0.0
    %1388 = vmatprep.subr.mxu0 0.0
    %1389 = vmatpush2.xpose.msra.mxu0 0.0
    %1390 = vmatprep.subr.mxu0 0.0
    %1391 = vmatpush2.xpose.msra.mxu0 0.0
    %1392 = vmatprep.subr.mxu0 0.0
    %1393 = vmatpush2.xpose.msra.mxu0 0.0
    %1394 = vmatprep.subr.mxu0 0.0
    %1395 = vmatpush2.xpose.msra.mxu0 0.0
    %1396 = vmatprep.subr.mxu0 0.0
    %1397 = vmatpush2.xpose.msra.mxu0 0.0
    %1398 = vmatprep.subr.mxu0 0.0
    %1399 = vmatpush2.xpose.msra.mxu0 0.0
    %1400 = vmatprep.subr.mxu0 0.0
    %1401 = vmatpush2.xpose.msra.mxu0 0.0
    %1402 = vmatprep.subr.mxu0 0.0
    %1403 = vmatpush2.xpose.msra.mxu0 0.0
    %1404 = vmatprep.subr.mxu0 0.0
    %1405 = vmatpush2.xpose.msra.mxu0 0.0
    %1406 = vmatprep.subr.mxu0 0.0
    %1407 = vmatpush2.xpose.msra.mxu0 0.0
    %1408 = vmatprep.subr.mxu0 0.0
    %1409 = vmatpush2.xpose.msra.mxu0 0.0
    %1410 = vmatprep.subr.mxu0 0.0
    %1411 = vmatpush2.xpose.msra.mxu0 0.0
    %1412 = vmatprep.subr.mxu0 0.0
    %1413 = vmatpush2.xpose.msra.mxu0 0.0
    %1414 = vmatprep.subr.mxu0 0.0
    %1415 = vmatpush2.xpose.msra.mxu0 0.0
    %1416 = vmatprep.subr.mxu0 0.0
    %1417 = vmatpush2.xpose.msra.mxu0 0.0
    %1418 = vmatprep.mubr.f32.mxu0 0.0
    %1419 = vmatmul.mubr.f32.gmra.mxu0 %v1337
    %v1420 = vpop.f32.mrf.mxu0
    %v1421 = vadd.f32 0.0, %v1420
    %v1422 = vpop.f32.mrf.mxu0
    %1423 = vmatprep.mubr.f32.mxu0 0.0
    %1424 = vmatmul.mubr.f32.gmra.mxu0 %v1340
    %v1425 = vpop.f32.mrf.mxu0
    %v1426 = vadd.f32 0.0, %v1425
    %v1427 = vpop.f32.mrf.mxu0
    %1428 = vmatprep.mubr.f32.mxu0 0.0
    %1429 = vmatmul.mubr.f32.gmra.mxu0 %v1343
    %v1430 = vpop.f32.mrf.mxu0
    %v1431 = vadd.f32 0.0, %v1430
    %v1432 = vpop.f32.mrf.mxu0
    %1433 = vmatprep.mubr.f32.mxu0 0.0
    %1434 = vmatmul.mubr.f32.gmra.mxu0 %v1346
    %v1435 = vpop.f32.mrf.mxu0
    %v1436 = vadd.f32 0.0, %v1435
    %v1437 = vpop.f32.mrf.mxu0
    %1438 = vdwg.mxu0
    %v1439 = vmul.f32 %v1318, 0.0070710676
    %v1440 = vmul.f32 %v1323, 0.0070710676
    %v1441 = vmul.f32 %v1328, 0.0070710676
    %v1442 = vmul.f32 %v1333, 0.0070710676
    %v1443 = vmul.f32 %v1421, 0.0070710676
    %v1444 = vmul.f32 %v1426, 0.0070710676
    %v1445 = vmul.f32 %v1431, 0.0070710676
    %v1446 = vmul.f32 %v1436, 0.0070710676
    %v1447 = vtanh.pop %v1439
    %v1448 = vtanh.pop %v1440
    %v1449 = vtanh.pop %v1441
    %v1450 = vtanh.pop %v1442
    %v1451 = vtanh.pop %v1443
    %v1452 = vtanh.pop %v1444
    %v1453 = vtanh.pop %v1445
    %v1454 = vtanh.pop %v1446
    %v1455 = vmul.f32 %v1447, 50.0
    %v1456 = vmul.f32 %v1448, 50.0
    %v1457 = vmul.f32 %v1449, 50.0
    %v1458 = vmul.f32 %v1450, 50.0
    %v1459 = vmul.f32 %v1451, 50.0
    %v1460 = vmul.f32 %v1452, 50.0
    %v1461 = vmul.f32 %v1453, 50.0
    %v1462 = vmul.f32 %v1454, 50.0
    %v1463 = vld [vmem:[%s8] sm:$0xff]
    %v1464 = vld [vmem:[%s8 + $0x8] sm:$0xff]
    %v1465 = vld [vmem:[%s8 + $0x10] sm:$0xff]
    %v1466 = vld [vmem:[%s8 + $0x18] sm:$0xff]
    %v1467 = vadd.f32 %v1455, %v1463
    %v1468 = vadd.f32 %v1456, %v1464
    %v1469 = vadd.f32 %v1457, %v1465
    %v1470 = vadd.f32 %v1458, %v1466
    %v1471 = vadd.f32 %v1459, %v1463
    %v1472 = vadd.f32 %v1460, %v1464
    %v1473 = vadd.f32 %v1461, %v1465
    %v1474 = vadd.f32 %v1462, %v1466
    %vm1475 = vcmask 130048
    %v1476 = vsel %vm1475, %v1467, -inf
    %1477 = vmax.xlane.f32.xlu0 %v1476
    %v1478 = vpop.xlane.xlu0 %1477
    %v1479 = vsel %vm1475, %v1468, -inf
    %1480 = vmax.xlane.f32.xlu0 %v1479
    %v1481 = vpop.xlane.xlu0 %1480
    %v1482 = vsel %vm1475, %v1469, -inf
    %1483 = vmax.xlane.f32.xlu0 %v1482
    %v1484 = vpop.xlane.xlu0 %1483
    %v1485 = vsel %vm1475, %v1470, -inf
    %1486 = vmax.xlane.f32.xlu0 %v1485
    %v1487 = vpop.xlane.xlu0 %1486
    %v1488 = vsel %vm1475, %v1471, -inf
    %1489 = vmax.xlane.f32.xlu0 %v1488
    %v1490 = vpop.xlane.xlu0 %1489
    %v1491 = vsel %vm1475, %v1472, -inf
    %1492 = vmax.xlane.f32.xlu0 %v1491
    %v1493 = vpop.xlane.xlu0 %1492
    %v1494 = vsel %vm1475, %v1473, -inf
    %1495 = vmax.xlane.f32.xlu0 %v1494
    %v1496 = vpop.xlane.xlu0 %1495
    %v1497 = vsel %vm1475, %v1474, -inf
    %1498 = vmax.xlane.f32.xlu0 %v1497
    %v1499 = vpop.xlane.xlu0 %1498
    %v1500 = vsub.f32 %v1467, %v1478
    %v1501 = vsub.f32 %v1468, %v1481
    %v1502 = vsub.f32 %v1469, %v1484
    %v1503 = vsub.f32 %v1470, %v1487
    %v1504 = vsub.f32 %v1471, %v1490
    %v1505 = vsub.f32 %v1472, %v1493
    %v1506 = vsub.f32 %v1473, %v1496
    %v1507 = vsub.f32 %v1474, %v1499
    %v1508 = vmul.f32 %v1500, 1.442695
    %v1509 = vpow.pop %v1508
    %v1510 = vmul.f32 %v1501, 1.442695
    %v1511 = vpow.pop %v1510
    %v1512 = vmul.f32 %v1502, 1.442695
    %v1513 = vpow.pop %v1512
    %v1514 = vmul.f32 %v1503, 1.442695
    %v1515 = vpow.pop %v1514
    %v1516 = vmul.f32 %v1504, 1.442695
    %v1517 = vpow.pop %v1516
    %v1518 = vmul.f32 %v1505, 1.442695
    %v1519 = vpow.pop %v1518
    %v1520 = vmul.f32 %v1506, 1.442695
    %v1521 = vpow.pop %v1520
    %v1522 = vmul.f32 %v1507, 1.442695
    %v1523 = vpow.pop %v1522
    %v1524 = vsel %vm1475, %v1509, 0.0
    %1525 = vadd.xlane.f32.xlu0 %v1524
    %v1526 = vpop.xlane.xlu0 %1525
    %v1527 = vsel %vm1475, %v1511, 0.0
    %1528 = vadd.xlane.f32.xlu0 %v1527
    %v1529 = vpop.xlane.xlu0 %1528
    %v1530 = vsel %vm1475, %v1513, 0.0
    %1531 = vadd.xlane.f32.xlu0 %v1530
    %v1532 = vpop.xlane.xlu0 %1531
    %v1533 = vsel %vm1475, %v1515, 0.0
    %1534 = vadd.xlane.f32.xlu0 %v1533
    %v1535 = vpop.xlane.xlu0 %1534
    %v1536 = vsel %vm1475, %v1517, 0.0
    %1537 = vadd.xlane.f32.xlu0 %v1536
    %v1538 = vpop.xlane.xlu0 %1537
    %v1539 = vsel %vm1475, %v1519, 0.0
    %1540 = vadd.xlane.f32.xlu0 %v1539
    %v1541 = vpop.xlane.xlu0 %1540
    %v1542 = vsel %vm1475, %v1521, 0.0
    %1543 = vadd.xlane.f32.xlu0 %v1542
    %v1544 = vpop.xlane.xlu0 %1543
    %v1545 = vsel %vm1475, %v1523, 0.0
    %1546 = vadd.xlane.f32.xlu0 %v1545
    %v1547 = vpop.xlane.xlu0 %1546
    %v1548 = vrcp.pop %v1526
    %v1549 = vrcp.pop %v1529
    %v1550 = vrcp.pop %v1532
    %v1551 = vrcp.pop %v1535
    %v1552 = vrcp.pop %v1538
    %v1553 = vrcp.pop %v1541
    %v1554 = vrcp.pop %v1544
    %v1555 = vrcp.pop %v1547
    %v1556 = vmul.f32 %v1509, %v1548
    %v1557 = vmul.f32 %v1511, %v1549
    %v1558 = vmul.f32 %v1513, %v1550
    %v1559 = vmul.f32 %v1515, %v1551
    %v1560 = vmul.f32 %v1517, %v1552
    %v1561 = vmul.f32 %v1519, %v1553
    %v1562 = vmul.f32 %v1521, %v1554
    %v1563 = vmul.f32 %v1523, %v1555
    %v1565 = vsel %vm1475, %v1556, 0
    %v1568 = vsel %vm1475, %v1557, 0
    %v1571 = vsel %vm1475, %v1558, 0
    %v1574 = vsel %vm1475, %v1559, 0
    %1576 = vmatprep.subr.mxu0 0.0
    %1577 = vmatpush1.msra.mxu0 0.0
    %1578 = vmatprep.subr.mxu0 0.0
    %1579 = vmatpush1.msra.mxu0 0.0
    %1580 = vmatprep.subr.mxu0 0.0
    %1581 = vmatpush1.msra.mxu0 0.0
    %1582 = vmatprep.subr.mxu0 0.0
    %1583 = vmatpush1.msra.mxu0 0.0
    %1584 = vmatprep.subr.mxu0 0.0
    %1585 = vmatpush1.msra.mxu0 0.0
    %1586 = vmatprep.subr.mxu0 0.0
    %1587 = vmatpush1.msra.mxu0 0.0
    %1588 = vmatprep.subr.mxu0 0.0
    %1589 = vmatpush1.msra.mxu0 0.0
    %1590 = vmatprep.subr.mxu0 0.0
    %1591 = vmatpush1.msra.mxu0 0.0
    %1592 = vmatprep.subr.mxu0 0.0
    %1593 = vmatpush1.msra.mxu0 0.0
    %1594 = vmatprep.subr.mxu0 0.0
    %1595 = vmatpush1.msra.mxu0 0.0
    %1596 = vmatprep.subr.mxu0 0.0
    %1597 = vmatpush1.msra.mxu0 0.0
    %1598 = vmatprep.subr.mxu0 0.0
    %1599 = vmatpush1.msra.mxu0 0.0
    %1600 = vmatprep.subr.mxu0 0.0
    %1601 = vmatpush1.msra.mxu0 0.0
    %1602 = vmatprep.subr.mxu0 0.0
    %1603 = vmatpush1.msra.mxu0 0.0
    %1604 = vmatprep.subr.mxu0 0.0
    %1605 = vmatpush1.msra.mxu0 %v623
    %1606 = vmatprep.subr.mxu0 0.0
    %1607 = vmatpush1.msra.mxu0 %v618
    %1608 = vmatprep.subr.mxu0 0.0
    %1609 = vmatpush2.msra.mxu0 0.0
    %1610 = vmatprep.subr.mxu0 0.0
    %1611 = vmatpush2.msra.mxu0 0.0
    %1612 = vmatprep.subr.mxu0 0.0
    %1613 = vmatpush2.msra.mxu0 0.0
    %1614 = vmatprep.subr.mxu0 0.0
    %1615 = vmatpush2.msra.mxu0 0.0
    %1616 = vmatprep.subr.mxu0 0.0
    %1617 = vmatpush2.msra.mxu0 0.0
    %1618 = vmatprep.subr.mxu0 0.0
    %1619 = vmatpush2.msra.mxu0 0.0
    %1620 = vmatprep.subr.mxu0 0.0
    %1621 = vmatpush2.msra.mxu0 0.0
    %1622 = vmatprep.subr.mxu0 0.0
    %1623 = vmatpush2.msra.mxu0 0.0
    %1624 = vmatprep.subr.mxu0 0.0
    %1625 = vmatpush2.msra.mxu0 0.0
    %1626 = vmatprep.subr.mxu0 0.0
    %1627 = vmatpush2.msra.mxu0 0.0
    %1628 = vmatprep.subr.mxu0 0.0
    %1629 = vmatpush2.msra.mxu0 0.0
    %1630 = vmatprep.subr.mxu0 0.0
    %1631 = vmatpush2.msra.mxu0 0.0
    %1632 = vmatprep.subr.mxu0 0.0
    %1633 = vmatpush2.msra.mxu0 0.0
    %1634 = vmatprep.subr.mxu0 0.0
    %1635 = vmatpush2.msra.mxu0 0.0
    %1636 = vmatprep.subr.mxu0 0.0
    %1637 = vmatpush2.msra.mxu0 0.0
    %1638 = vmatprep.subr.mxu0 0.0
    %1639 = vmatpush2.msra.mxu0 0.0
    %1640 = vmatprep.mubr.f32.mxu0 0.0
    %1641 = vmatmul.mubr.f32.gmra.mxu0 %v1565
    %v1642 = vpop.f32.mrf.mxu0
    %v1643 = vadd.f32 0.0, %v1642
    %v1644 = vpop.f32.mrf.mxu0
    %1645 = vmatprep.mubr.f32.mxu0 0.0
    %1646 = vmatmul.mubr.f32.gmra.mxu0 %v1568
    %v1647 = vpop.f32.mrf.mxu0
    %v1648 = vadd.f32 0.0, %v1647
    %v1649 = vpop.f32.mrf.mxu0
    %1650 = vmatprep.mubr.f32.mxu0 0.0
    %1651 = vmatmul.mubr.f32.gmra.mxu0 %v1571
    %v1652 = vpop.f32.mrf.mxu0
    %v1653 = vadd.f32 0.0, %v1652
    %v1654 = vpop.f32.mrf.mxu0
    %1655 = vmatprep.mubr.f32.mxu0 0.0
    %1656 = vmatmul.mubr.f32.gmra.mxu0 %v1574
    %v1657 = vpop.f32.mrf.mxu0
    %v1658 = vadd.f32 0.0, %v1657
    %v1659 = vpop.f32.mrf.mxu0
    %1660 = vdwg.mxu0
    %v1662 = vsel %vm1475, %v1560, 0
    %v1665 = vsel %vm1475, %v1561, 0
    %v1668 = vsel %vm1475, %v1562, 0
    %v1671 = vsel %vm1475, %v1563, 0
    %1673 = vmatprep.subr.mxu0 0.0
    %1674 = vmatpush1.msra.mxu0 0.0
    %1675 = vmatprep.subr.mxu0 0.0
    %1676 = vmatpush1.msra.mxu0 0.0
    %1677 = vmatprep.subr.mxu0 0.0
    %1678 = vmatpush1.msra.mxu0 0.0
    %1679 = vmatprep.subr.mxu0 0.0
    %1680 = vmatpush1.msra.mxu0 0.0
    %1681 = vmatprep.subr.mxu0 0.0
    %1682 = vmatpush1.msra.mxu0 0.0
    %1683 = vmatprep.subr.mxu0 0.0
    %1684 = vmatpush1.msra.mxu0 0.0
    %1685 = vmatprep.subr.mxu0 0.0
    %1686 = vmatpush1.msra.mxu0 0.0
    %1687 = vmatprep.subr.mxu0 0.0
    %1688 = vmatpush1.msra.mxu0 0.0
    %1689 = vmatprep.subr.mxu0 0.0
    %1690 = vmatpush1.msra.mxu0 0.0
    %1691 = vmatprep.subr.mxu0 0.0
    %1692 = vmatpush1.msra.mxu0 0.0
    %1693 = vmatprep.subr.mxu0 0.0
    %1694 = vmatpush1.msra.mxu0 0.0
    %1695 = vmatprep.subr.mxu0 0.0
    %1696 = vmatpush1.msra.mxu0 0.0
    %1697 = vmatprep.subr.mxu0 0.0
    %1698 = vmatpush1.msra.mxu0 0.0
    %1699 = vmatprep.subr.mxu0 0.0
    %1700 = vmatpush1.msra.mxu0 0.0
    %1701 = vmatprep.subr.mxu0 0.0
    %1702 = vmatpush1.msra.mxu0 %v698
    %1703 = vmatprep.subr.mxu0 0.0
    %1704 = vmatpush1.msra.mxu0 %v693
    %1705 = vmatprep.subr.mxu0 0.0
    %1706 = vmatpush2.msra.mxu0 0.0
    %1707 = vmatprep.subr.mxu0 0.0
    %1708 = vmatpush2.msra.mxu0 0.0
    %1709 = vmatprep.subr.mxu0 0.0
    %1710 = vmatpush2.msra.mxu0 0.0
    %1711 = vmatprep.subr.mxu0 0.0
    %1712 = vmatpush2.msra.mxu0 0.0
    %1713 = vmatprep.subr.mxu0 0.0
    %1714 = vmatpush2.msra.mxu0 0.0
    %1715 = vmatprep.subr.mxu0 0.0
    %1716 = vmatpush2.msra.mxu0 0.0
    %1717 = vmatprep.subr.mxu0 0.0
    %1718 = vmatpush2.msra.mxu0 0.0
    %1719 = vmatprep.subr.mxu0 0.0
    %1720 = vmatpush2.msra.mxu0 0.0
    %1721 = vmatprep.subr.mxu0 0.0
    %1722 = vmatpush2.msra.mxu0 0.0
    %1723 = vmatprep.subr.mxu0 0.0
    %1724 = vmatpush2.msra.mxu0 0.0
    %1725 = vmatprep.subr.mxu0 0.0
    %1726 = vmatpush2.msra.mxu0 0.0
    %1727 = vmatprep.subr.mxu0 0.0
    %1728 = vmatpush2.msra.mxu0 0.0
    %1729 = vmatprep.subr.mxu0 0.0
    %1730 = vmatpush2.msra.mxu0 0.0
    %1731 = vmatprep.subr.mxu0 0.0
    %1732 = vmatpush2.msra.mxu0 0.0
    %1733 = vmatprep.subr.mxu0 0.0
    %1734 = vmatpush2.msra.mxu0 0.0
    %1735 = vmatprep.subr.mxu0 0.0
    %1736 = vmatpush2.msra.mxu0 0.0
    %1737 = vmatprep.mubr.f32.mxu0 0.0
    %1738 = vmatmul.mubr.f32.gmra.mxu0 %v1662
    %v1739 = vpop.f32.mrf.mxu0
    %v1740 = vadd.f32 0.0, %v1739
    %v1741 = vpop.f32.mrf.mxu0
    %1742 = vmatprep.mubr.f32.mxu0 0.0
    %1743 = vmatmul.mubr.f32.gmra.mxu0 %v1665
    %v1744 = vpop.f32.mrf.mxu0
    %v1745 = vadd.f32 0.0, %v1744
    %v1746 = vpop.f32.mrf.mxu0
    %1747 = vmatprep.mubr.f32.mxu0 0.0
    %1748 = vmatmul.mubr.f32.gmra.mxu0 %v1668
    %v1749 = vpop.f32.mrf.mxu0
    %v1750 = vadd.f32 0.0, %v1749
    %v1751 = vpop.f32.mrf.mxu0
    %1752 = vmatprep.mubr.f32.mxu0 0.0
    %1753 = vmatmul.mubr.f32.gmra.mxu0 %v1671
    %v1754 = vpop.f32.mrf.mxu0
    %v1755 = vadd.f32 0.0, %v1754
    %v1756 = vpop.f32.mrf.mxu0
    %1757 = vdwg.mxu0
    %1760 = vrot.lane.b32.xlu0 %v1653, 8
    %v1761 = vpop.permute.xlu0 %1760
    %1762 = vrot.lane.b32.xlu0 %v1658, 8
    %v1763 = vpop.permute.xlu0 %1762
    %1768 = vrot.lane.b32.xlu0 %v1740, 16
    %v1769 = vpop.permute.xlu0 %1768
    %1770 = vrot.lane.b32.xlu0 %v1745, 16
    %v1771 = vpop.permute.xlu0 %1770
    %1776 = vrot.lane.b32.xlu0 %v1750, 24
    %v1777 = vpop.permute.xlu0 %1776
    %1778 = vrot.lane.b32.xlu0 %v1755, 24
    %v1779 = vpop.permute.xlu0 %1778
    %v1782 = vsel %vm710, %v1643, %v1761
    %v1783 = vsel %vm710, %v1648, %v1763
    %v1784 = vsel %vm1475, %v1782, %v1769
    %v1785 = vsel %vm1475, %v1783, %v1771
    %vm1786 = vcmask 195584
    %v1787 = vsel %vm1786, %v1784, %v1777
    %v1788 = vsel %vm1786, %v1785, %v1779
    %v1789 = vld [vmem:[%s3] sm:$0xff]
    %v1790 = vld [vmem:[%s3 + $0x8] sm:$0xff]
    %v1791 = vld [vmem:[%s3 + $0x10] sm:$0xff]
    %v1792 = vld [vmem:[%s3 + $0x18] sm:$0xff]
    %v1794 = vsel %vm38, %v1787, 0
    %v1797 = vsel %vm38, %v1788, 0
    %1799 = vmatprep.subr.mxu0 0.0
    %1800 = vmatpush1.msra.mxu0 0.0
    %1801 = vmatprep.subr.mxu0 0.0
    %1802 = vmatpush1.msra.mxu0 0.0
    %1803 = vmatprep.subr.mxu0 0.0
    %1804 = vmatpush1.msra.mxu0 0.0
    %1805 = vmatprep.subr.mxu0 0.0
    %1806 = vmatpush1.msra.mxu0 0.0
    %1807 = vmatprep.subr.mxu0 0.0
    %1808 = vmatpush1.msra.mxu0 0.0
    %1809 = vmatprep.subr.mxu0 0.0
    %1810 = vmatpush1.msra.mxu0 0.0
    %1811 = vmatprep.subr.mxu0 0.0
    %1812 = vmatpush1.msra.mxu0 0.0
    %1813 = vmatprep.subr.mxu0 0.0
    %1814 = vmatpush1.msra.mxu0 0.0
    %1815 = vmatprep.subr.mxu0 0.0
    %1816 = vmatpush1.msra.mxu0 0.0
    %1817 = vmatprep.subr.mxu0 0.0
    %1818 = vmatpush1.msra.mxu0 0.0
    %1819 = vmatprep.subr.mxu0 0.0
    %1820 = vmatpush1.msra.mxu0 0.0
    %1821 = vmatprep.subr.mxu0 0.0
    %1822 = vmatpush1.msra.mxu0 0.0
    %1823 = vmatprep.subr.mxu0 0.0
    %1824 = vmatpush1.msra.mxu0 %v1792
    %1825 = vmatprep.subr.mxu0 0.0
    %1826 = vmatpush1.msra.mxu0 %v1791
    %1827 = vmatprep.subr.mxu0 0.0
    %1828 = vmatpush1.msra.mxu0 %v1790
    %1829 = vmatprep.subr.mxu0 0.0
    %1830 = vmatpush1.msra.mxu0 %v1789
    %1831 = vmatprep.subr.mxu0 0.0
    %1832 = vmatpush2.msra.mxu0 0.0
    %1833 = vmatprep.subr.mxu0 0.0
    %1834 = vmatpush2.msra.mxu0 0.0
    %1835 = vmatprep.subr.mxu0 0.0
    %1836 = vmatpush2.msra.mxu0 0.0
    %1837 = vmatprep.subr.mxu0 0.0
    %1838 = vmatpush2.msra.mxu0 0.0
    %1839 = vmatprep.subr.mxu0 0.0
    %1840 = vmatpush2.msra.mxu0 0.0
    %1841 = vmatprep.subr.mxu0 0.0
    %1842 = vmatpush2.msra.mxu0 0.0
    %1843 = vmatprep.subr.mxu0 0.0
    %1844 = vmatpush2.msra.mxu0 0.0
    %1845 = vmatprep.subr.mxu0 0.0
    %1846 = vmatpush2.msra.mxu0 0.0
    %1847 = vmatprep.subr.mxu0 0.0
    %1848 = vmatpush2.msra.mxu0 0.0
    %1849 = vmatprep.subr.mxu0 0.0
    %1850 = vmatpush2.msra.mxu0 0.0
    %1851 = vmatprep.subr.mxu0 0.0
    %1852 = vmatpush2.msra.mxu0 0.0
    %1853 = vmatprep.subr.mxu0 0.0
    %1854 = vmatpush2.msra.mxu0 0.0
    %1855 = vmatprep.subr.mxu0 0.0
    %1856 = vmatpush2.msra.mxu0 0.0
    %1857 = vmatprep.subr.mxu0 0.0
    %1858 = vmatpush2.msra.mxu0 0.0
    %1859 = vmatprep.subr.mxu0 0.0
    %1860 = vmatpush2.msra.mxu0 0.0
    %1861 = vmatprep.subr.mxu0 0.0
    %1862 = vmatpush2.msra.mxu0 0.0
    %1863 = vmatprep.mubr.f32.mxu0 0.0
    %1864 = vmatmul.mubr.f32.gmra.mxu0 %v1794
    %v1865 = vpop.f32.mrf.mxu0
    %v1866 = vadd.f32 0.0, %v1865
    %v1867 = vpop.f32.mrf.mxu0
    %1868 = vmatprep.mubr.f32.mxu0 0.0
    %1869 = vmatmul.mubr.f32.gmra.mxu0 %v1797
    %v1870 = vpop.f32.mrf.mxu0
    %v1871 = vadd.f32 0.0, %v1870
    %v1872 = vpop.f32.mrf.mxu0
    %1873 = vdwg.mxu0
    %v1874 = vmul.f32 %v1866, %v1866
    %v1875 = vmul.f32 %v1871, %v1871
    %v1876 = vsel %vm38, %v1874, 0.0
    %1877 = vadd.xlane.f32.xlu0 %v1876
    %v1878 = vpop.xlane.xlu0 %1877
    %v1879 = vsel %vm38, %v1875, 0.0
    %1880 = vadd.xlane.f32.xlu0 %v1879
    %v1881 = vpop.xlane.xlu0 %1880
    %v1882 = vmul.f32 %v1878, %v45
    %v1883 = vmul.f32 %v1881, %v45
    %v1884 = vadd.f32 %v1882, 1e-06
    %v1885 = vadd.f32 %v1883, 1e-06
    %v1886 = vrsqrt.pop %v1884
    %v1887 = vrsqrt.pop %v1885
    %v1888 = vmul.f32 %v1866, %v1886
    %v1889 = vmul.f32 %v1871, %v1887
    %v1890 = vlaneseq
    %v1891 = vshrl.u32 %v1890, 7
    %v1892 = vsub.s32 1, %v1891
    %v1893 = vrot.slane %v54, %v1892
    %v1894 = vmul.f32 %v1888, %v1893
    %v1895 = vmul.f32 %v1889, %v1893
    %v1896 = vadd.f32 %v33, %v1894
    %v1897 = vadd.f32 %v34, %v1895
    %v1898 = vmul.f32 %v1896, %v1896
    %v1899 = vmul.f32 %v1897, %v1897
    %v1900 = vsel %vm38, %v1898, 0.0
    %1901 = vadd.xlane.f32.xlu0 %v1900
    %v1902 = vpop.xlane.xlu0 %1901
    %v1903 = vsel %vm38, %v1899, 0.0
    %1904 = vadd.xlane.f32.xlu0 %v1903
    %v1905 = vpop.xlane.xlu0 %1904
    %v1906 = vmul.f32 %v1902, %v45
    %v1907 = vmul.f32 %v1905, %v45
    %v1908 = vadd.f32 %v1906, 1e-06
    %v1909 = vadd.f32 %v1907, 1e-06
    %v1910 = vrsqrt.pop %v1908
    %v1911 = vrsqrt.pop %v1909
    %v1912 = vmul.f32 %v1896, %v1910
    %v1913 = vmul.f32 %v1897, %v1911
    %v1914 = vlaneseq
    %v1915 = vshrl.u32 %v1914, 7
    %v1916 = vsub.s32 2, %v1915
    %v1917 = vrot.slane %v54, %v1916
    %v1918 = vmul.f32 %v1912, %v1917
    %v1919 = vmul.f32 %v1913, %v1917
    %v1920 = vld [vmem:[%s4] sm:$0xff]
    %v1921 = vld [vmem:[%s4 + $0x8] sm:$0xff]
    %v1922 = vld [vmem:[%s4 + $0x10] sm:$0xff]
    %v1923 = vld [vmem:[%s4 + $0x18] sm:$0xff]
    %v1925 = vsel %vm38, %v1918, 0
    %v1928 = vsel %vm38, %v1919, 0
    %1930 = vmatprep.subr.mxu0 0.0
    %1931 = vmatpush1.msra.mxu0 0.0
    %1932 = vmatprep.subr.mxu0 0.0
    %1933 = vmatpush1.msra.mxu0 0.0
    %1934 = vmatprep.subr.mxu0 0.0
    %1935 = vmatpush1.msra.mxu0 0.0
    %1936 = vmatprep.subr.mxu0 0.0
    %1937 = vmatpush1.msra.mxu0 0.0
    %1938 = vmatprep.subr.mxu0 0.0
    %1939 = vmatpush1.msra.mxu0 0.0
    %1940 = vmatprep.subr.mxu0 0.0
    %1941 = vmatpush1.msra.mxu0 0.0
    %1942 = vmatprep.subr.mxu0 0.0
    %1943 = vmatpush1.msra.mxu0 0.0
    %1944 = vmatprep.subr.mxu0 0.0
    %1945 = vmatpush1.msra.mxu0 0.0
    %1946 = vmatprep.subr.mxu0 0.0
    %1947 = vmatpush1.msra.mxu0 0.0
    %1948 = vmatprep.subr.mxu0 0.0
    %1949 = vmatpush1.msra.mxu0 0.0
    %1950 = vmatprep.subr.mxu0 0.0
    %1951 = vmatpush1.msra.mxu0 0.0
    %1952 = vmatprep.subr.mxu0 0.0
    %1953 = vmatpush1.msra.mxu0 0.0
    %1954 = vmatprep.subr.mxu0 0.0
    %1955 = vmatpush1.msra.mxu0 %v1923
    %1956 = vmatprep.subr.mxu0 0.0
    %1957 = vmatpush1.msra.mxu0 %v1922
    %1958 = vmatprep.subr.mxu0 0.0
    %1959 = vmatpush1.msra.mxu0 %v1921
    %1960 = vmatprep.subr.mxu0 0.0
    %1961 = vmatpush1.msra.mxu0 %v1920
    %1962 = vmatprep.subr.mxu0 0.0
    %1963 = vmatpush2.msra.mxu0 0.0
    %1964 = vmatprep.subr.mxu0 0.0
    %1965 = vmatpush2.msra.mxu0 0.0
    %1966 = vmatprep.subr.mxu0 0.0
    %1967 = vmatpush2.msra.mxu0 0.0
    %1968 = vmatprep.subr.mxu0 0.0
    %1969 = vmatpush2.msra.mxu0 0.0
    %1970 = vmatprep.subr.mxu0 0.0
    %1971 = vmatpush2.msra.mxu0 0.0
    %1972 = vmatprep.subr.mxu0 0.0
    %1973 = vmatpush2.msra.mxu0 0.0
    %1974 = vmatprep.subr.mxu0 0.0
    %1975 = vmatpush2.msra.mxu0 0.0
    %1976 = vmatprep.subr.mxu0 0.0
    %1977 = vmatpush2.msra.mxu0 0.0
    %1978 = vmatprep.subr.mxu0 0.0
    %1979 = vmatpush2.msra.mxu0 0.0
    %1980 = vmatprep.subr.mxu0 0.0
    %1981 = vmatpush2.msra.mxu0 0.0
    %1982 = vmatprep.subr.mxu0 0.0
    %1983 = vmatpush2.msra.mxu0 0.0
    %1984 = vmatprep.subr.mxu0 0.0
    %1985 = vmatpush2.msra.mxu0 0.0
    %1986 = vmatprep.subr.mxu0 0.0
    %1987 = vmatpush2.msra.mxu0 0.0
    %1988 = vmatprep.subr.mxu0 0.0
    %1989 = vmatpush2.msra.mxu0 0.0
    %1990 = vmatprep.subr.mxu0 0.0
    %1991 = vmatpush2.msra.mxu0 0.0
    %1992 = vmatprep.subr.mxu0 0.0
    %1993 = vmatpush2.msra.mxu0 0.0
    %1994 = vmatprep.mubr.f32.mxu0 0.0
    %1995 = vmatmul.mubr.f32.gmra.mxu0 %v1925
    %v1996 = vpop.f32.mrf.mxu0
    %v1997 = vadd.f32 0.0, %v1996
    %v1998 = vpop.f32.mrf.mxu0
    %1999 = vmatprep.mubr.f32.mxu0 0.0
    %2000 = vmatmul.mubr.f32.gmra.mxu0 %v1928
    %v2001 = vpop.f32.mrf.mxu0
    %v2002 = vadd.f32 0.0, %v2001
    %v2003 = vpop.f32.mrf.mxu0
    %2004 = vdwg.mxu0
    %v2005 = vmul.f32 %v1997, 0.5
    %v2006 = vmul.f32 %v2002, 0.5
    %v2007 = vmul.f32 %v1997, 0.044715
    %v2008 = vmul.f32 %v2002, 0.044715
    %v2009 = vmul.f32 %v2007, %v1997
    %v2010 = vmul.f32 %v2008, %v2002
    %v2011 = vmul.f32 %v2009, %v1997
    %v2012 = vmul.f32 %v2010, %v2002
    %v2013 = vadd.f32 %v1997, %v2011
    %v2014 = vadd.f32 %v2002, %v2012
    %v2015 = vmul.f32 %v2013, 0.7978846
    %v2016 = vmul.f32 %v2014, 0.7978846
    %v2017 = vtanh.pop %v2015
    %v2018 = vtanh.pop %v2016
    %v2019 = vadd.f32 %v2017, 1.0
    %v2020 = vadd.f32 %v2018, 1.0
    %v2021 = vmul.f32 %v2005, %v2019
    %v2022 = vmul.f32 %v2006, %v2020
    %2025 = vrot.lane.b32.xlu0 %v1997, 64
    %v2026 = vpop.permute.xlu0 %2025
    %2027 = vrot.lane.b32.xlu0 %v2002, 64
    %v2028 = vpop.permute.xlu0 %2027
    %v2031 = vmul.f32 %v2021, %v2026
    %v2032 = vmul.f32 %v2022, %v2028
    %v2033 = vld [vmem:[%s5] sm:$0xff]
    %v2034 = vld [vmem:[%s5 + $0x8] sm:$0xff]
    %v2035 = vld [vmem:[%s5 + $0x10] sm:$0xff]
    %v2036 = vld [vmem:[%s5 + $0x18] sm:$0xff]
    %v2037 = vld [vmem:[%s5 + $0x20] sm:$0xff]
    %v2038 = vld [vmem:[%s5 + $0x28] sm:$0xff]
    %v2039 = vld [vmem:[%s5 + $0x30] sm:$0xff]
    %v2040 = vld [vmem:[%s5 + $0x38] sm:$0xff]
    %vm2041 = vcmask 523264
    %v2043 = vsel %vm2041, %v2031, 0
    %v2046 = vsel %vm2041, %v2032, 0
    %2048 = vmatprep.subr.mxu0 0.0
    %2049 = vmatpush1.msra.mxu0 0.0
    %2050 = vmatprep.subr.mxu0 0.0
    %2051 = vmatpush1.msra.mxu0 0.0
    %2052 = vmatprep.subr.mxu0 0.0
    %2053 = vmatpush1.msra.mxu0 0.0
    %2054 = vmatprep.subr.mxu0 0.0
    %2055 = vmatpush1.msra.mxu0 0.0
    %2056 = vmatprep.subr.mxu0 0.0
    %2057 = vmatpush1.msra.mxu0 0.0
    %2058 = vmatprep.subr.mxu0 0.0
    %2059 = vmatpush1.msra.mxu0 0.0
    %2060 = vmatprep.subr.mxu0 0.0
    %2061 = vmatpush1.msra.mxu0 0.0
    %2062 = vmatprep.subr.mxu0 0.0
    %2063 = vmatpush1.msra.mxu0 0.0
    %2064 = vmatprep.subr.mxu0 0.0
    %2065 = vmatpush1.msra.mxu0 %v2040
    %2066 = vmatprep.subr.mxu0 0.0
    %2067 = vmatpush1.msra.mxu0 %v2039
    %2068 = vmatprep.subr.mxu0 0.0
    %2069 = vmatpush1.msra.mxu0 %v2038
    %2070 = vmatprep.subr.mxu0 0.0
    %2071 = vmatpush1.msra.mxu0 %v2037
    %2072 = vmatprep.subr.mxu0 0.0
    %2073 = vmatpush1.msra.mxu0 %v2036
    %2074 = vmatprep.subr.mxu0 0.0
    %2075 = vmatpush1.msra.mxu0 %v2035
    %2076 = vmatprep.subr.mxu0 0.0
    %2077 = vmatpush1.msra.mxu0 %v2034
    %2078 = vmatprep.subr.mxu0 0.0
    %2079 = vmatpush1.msra.mxu0 %v2033
    %2080 = vmatprep.subr.mxu0 0.0
    %2081 = vmatpush2.msra.mxu0 0.0
    %2082 = vmatprep.subr.mxu0 0.0
    %2083 = vmatpush2.msra.mxu0 0.0
    %2084 = vmatprep.subr.mxu0 0.0
    %2085 = vmatpush2.msra.mxu0 0.0
    %2086 = vmatprep.subr.mxu0 0.0
    %2087 = vmatpush2.msra.mxu0 0.0
    %2088 = vmatprep.subr.mxu0 0.0
    %2089 = vmatpush2.msra.mxu0 0.0
    %2090 = vmatprep.subr.mxu0 0.0
    %2091 = vmatpush2.msra.mxu0 0.0
    %2092 = vmatprep.subr.mxu0 0.0
    %2093 = vmatpush2.msra.mxu0 0.0
    %2094 = vmatprep.subr.mxu0 0.0
    %2095 = vmatpush2.msra.mxu0 0.0
    %2096 = vmatprep.subr.mxu0 0.0
    %2097 = vmatpush2.msra.mxu0 0.0
    %2098 = vmatprep.subr.mxu0 0.0
    %2099 = vmatpush2.msra.mxu0 0.0
    %2100 = vmatprep.subr.mxu0 0.0
    %2101 = vmatpush2.msra.mxu0 0.0
    %2102 = vmatprep.subr.mxu0 0.0
    %2103 = vmatpush2.msra.mxu0 0.0
    %2104 = vmatprep.subr.mxu0 0.0
    %2105 = vmatpush2.msra.mxu0 0.0
    %2106 = vmatprep.subr.mxu0 0.0
    %2107 = vmatpush2.msra.mxu0 0.0
    %2108 = vmatprep.subr.mxu0 0.0
    %2109 = vmatpush2.msra.mxu0 0.0
    %2110 = vmatprep.subr.mxu0 0.0
    %2111 = vmatpush2.msra.mxu0 0.0
    %2112 = vmatprep.mubr.f32.mxu0 0.0
    %2113 = vmatmul.mubr.f32.gmra.mxu0 %v2043
    %v2114 = vpop.f32.mrf.mxu0
    %v2115 = vadd.f32 0.0, %v2114
    %v2116 = vpop.f32.mrf.mxu0
    %2117 = vmatprep.mubr.f32.mxu0 0.0
    %2118 = vmatmul.mubr.f32.gmra.mxu0 %v2046
    %v2119 = vpop.f32.mrf.mxu0
    %v2120 = vadd.f32 0.0, %v2119
    %v2121 = vpop.f32.mrf.mxu0
    %2122 = vdwg.mxu0
    %v2123 = vmul.f32 %v2115, %v2115
    %v2124 = vmul.f32 %v2120, %v2120
    %v2125 = vsel %vm38, %v2123, 0.0
    %2126 = vadd.xlane.f32.xlu0 %v2125
    %v2127 = vpop.xlane.xlu0 %2126
    %v2128 = vsel %vm38, %v2124, 0.0
    %2129 = vadd.xlane.f32.xlu0 %v2128
    %v2130 = vpop.xlane.xlu0 %2129
    %v2131 = vmul.f32 %v2127, %v45
    %v2132 = vmul.f32 %v2130, %v45
    %v2133 = vadd.f32 %v2131, 1e-06
    %v2134 = vadd.f32 %v2132, 1e-06
    %v2135 = vrsqrt.pop %v2133
    %v2136 = vrsqrt.pop %v2134
    %v2137 = vmul.f32 %v2115, %v2135
    %v2138 = vmul.f32 %v2120, %v2136
    %v2139 = vlaneseq
    %v2140 = vshrl.u32 %v2139, 7
    %v2141 = vsub.s32 3, %v2140
    %v2142 = vrot.slane %v54, %v2141
    %v2143 = vmul.f32 %v2137, %v2142
    %v2144 = vmul.f32 %v2138, %v2142
    %v2145 = vadd.f32 %v1896, %v2143
    %v2146 = vadd.f32 %v1897, %v2144
    %2147 = vst.msk [vmem:[#allocation2] sm:$0xff] %vm38, %v2145
    %2148 = vst.msk [vmem:[#allocation2 + $0x8] sm:$0xff] %vm38, %v2146
    // Predicated region
    $region38: #{tpu_custom_call.1} parent=1 // pred_check
      _
    $region39: #{tpu_custom_call.1} parent=1 // pred_check_branch
      %2150 = sbr.rel (0) target = $region41
    $region40: #{tpu_custom_call.1} parent=1 // pred_region
      %s2152 = ssub.s32 256, 256
      %2153 = vsyncadd [#allocation3], %s2152
      %s2154 = sshll.u32 [#allocation2], 4
      %s2155 = int_to_ptr.vmem [resolvable:$true] %s2154
      %2160 = dma.vmem_to_hbm [thread:$0]  %s2155, 256, %s9, [#allocation3], 128, 128, 8
    $region41: #{tpu_custom_call.1} parent=1 // pred_fallthru
      _
    // Predicated region
    $region42: #{tpu_custom_call.1} parent=1 // pred_check
      _
    $region43: #{tpu_custom_call.1} parent=1 // pred_check_branch
      %2162 = sbr.rel (0) target = $region45
    $region44: #{tpu_custom_call.1} parent=1 // pred_region
      %2163 = dma.done [#allocation3], 256
    $region45: #{tpu_custom_call.1} parent=1 // pred_fallthru
      _
    %2164 = vsyncpa [#allocation3], 1

</llo_original>
